<compile_context>
chip_gen: v7x
topology: tpu7x:2x2x1
jax: 0.10.0
libtpu: 0.0.40
codegen_flags: <defaults>
</compile_context>

<pallas_src>
import math
from functools import partial

import jax
import jax.numpy as jnp
from jax.experimental import pallas as pl
from jax.experimental.pallas import tpu as pltpu

EPS = 1e-5  # nn.BatchNorm2d default eps


# ------------------------------ compiler params ------------------------------

def _vmem_limit_bytes():
    # 3/4 of physical VMEM: 96 MiB on v5e/v6e (128 MiB), 48 MiB on v7x (64 MiB).
    try:
        cap = int(pltpu.get_tpu_info().vmem_capacity_bytes)
    except Exception:
        cap = 128 * 1024 * 1024
    return int(cap * 3 // 4)


_VMEM_LIMIT = _vmem_limit_bytes()


def _cparams(*sems):
    return pltpu.CompilerParams(dimension_semantics=tuple(sems),
                                vmem_limit_bytes=_VMEM_LIMIT)


# ------------------------------ tiling helpers -------------------------------

def _round_up(x, m):
    return (x + m - 1) // m * m


def _choose_m_tile(M):
    """Row tiling for the fused conv matmul."""
    for t in (512, 256, 128):
        if M % t == 0:
            return t, M
    if M <= 512:
        Mp = _round_up(M, 8)          # single (lightly padded) tile
        return Mp, Mp
    Mp = _round_up(M, 256)
    return 256, Mp


def _choose_n_tile(N):
    """Column tiling for the fused conv matmul (full weight column blocks)."""
    if N <= 512:
        return N, N
    if N % 512 == 0:
        return 512, N
    Np = _round_up(N, 512)
    return 512, Np


def _choose_row_tile(M, C, bytes_per_elem):
    """Byte-budgeted row tiling for elementwise kernels (BN apply, maxpool)."""
    budget_rows = max(8, (8 * 1024 * 1024) // max(C * bytes_per_elem, 1))
    for t in (1024, 512, 256, 128, 64, 32, 16, 8):
        if t <= budget_rows and M % t == 0:
            return t, M
    if M <= 1024:
        Mp = _round_up(M, 8)
        return Mp, Mp
    Mp = _round_up(M, 128)
    return 128, Mp


# ------------------------------ Pallas kernels -------------------------------

def _mm_stats_kernel(a_ref, b_ref, y_ref, psum_ref, psq_ref):
    """bf16 MXU matmul tile + fused per-channel sum / sumsq accumulation."""
    mi = pl.program_id(2)

    @pl.when(mi == 0)
    def _():
        psum_ref[...] = jnp.zeros_like(psum_ref)
        psq_ref[...] = jnp.zeros_like(psq_ref)

    acc = jnp.dot(a_ref[...], b_ref[...], preferred_element_type=jnp.float32)
    y_ref[...] = acc.astype(y_ref.dtype)
    rs = jnp.sum(acc, axis=0, keepdims=True)          # (1, tn)
    rq = jnp.sum(acc * acc, axis=0, keepdims=True)    # (1, tn)
    # Stats blocks are (8, tn); broadcast so every sublane row carries the
    # same partial sum (accounted for by the 1/(8*M) factor downstream).
    psum_ref[...] += jnp.broadcast_to(rs, psum_ref.shape)
    psq_ref[...] += jnp.broadcast_to(rq, psq_ref.shape)


def matmul_bn_stats(a, b):
    """(M,K)@(K,N) -> bf16 (M,N) plus per-channel partial sum/sumsq (f32)."""
    M, K = a.shape
    Kb, N = b.shape
    assert K == Kb
    a = a.astype(jnp.bfloat16)
    b = b.astype(jnp.bfloat16)
    tm, Mp = _choose_m_tile(M)
    tn, Np = _choose_n_tile(N)
    if Mp != M:
        a = jnp.pad(a, ((0, Mp - M), (0, 0)))       # zero rows: stats-safe
    if Np != N:
        b = jnp.pad(b, ((0, 0), (0, Np - N)))
    n_m = Mp // tm
    n_mo = 2 if (n_m >= 2 and n_m % 2 == 0) else 1  # parallel M split (v7x)
    n_mi = n_m // n_mo
    n_j = Np // tn

    y, psum, psq = pl.pallas_call(
        _mm_stats_kernel,
        out_shape=(jax.ShapeDtypeStruct((Mp, Np), jnp.bfloat16),
                   jax.ShapeDtypeStruct((8 * n_mo, Np), jnp.float32),
                   jax.ShapeDtypeStruct((8 * n_mo, Np), jnp.float32)),
        grid=(n_mo, n_j, n_mi),
        in_specs=[
            pl.BlockSpec((tm, K), lambda mo, j, mi: (mo * n_mi + mi, 0)),
            pl.BlockSpec((K, tn), lambda mo, j, mi: (0, j)),
        ],
        out_specs=(
            pl.BlockSpec((tm, tn), lambda mo, j, mi: (mo * n_mi + mi, j)),
            pl.BlockSpec((8, tn), lambda mo, j, mi: (mo, j)),
            pl.BlockSpec((8, tn), lambda mo, j, mi: (mo, j)),
        ),
        compiler_params=_cparams("parallel", "parallel", "arbitrary"),
    )(a, b)
    if Mp != M or Np != N:
        y = y[:M, :N]
    if Np != N:
        psum = psum[:, :N]
        psq = psq[:, :N]
    return y, psum, psq


def _bn_apply_kernel(y_ref, psum_ref, psq_ref, g_ref, b_ref, o_ref,
                     *, inv_cnt, relu):
    s1 = jnp.sum(psum_ref[...], axis=0, keepdims=True)
    s2 = jnp.sum(psq_ref[...], axis=0, keepdims=True)
    mean = s1 * inv_cnt
    var = jnp.maximum(s2 * inv_cnt - mean * mean, 0.0)
    scale = g_ref[...] * jax.lax.rsqrt(var + EPS)
    shift = b_ref[...] - mean * scale
    out = y_ref[...].astype(jnp.float32) * scale + shift
    if relu:
        out = jnp.maximum(out, 0.0)
    o_ref[...] = out.astype(o_ref.dtype)


def _bn_apply_res_kernel(y_ref, psum_ref, psq_ref, g_ref, b_ref, r_ref, o_ref,
                         *, inv_cnt, relu):
    s1 = jnp.sum(psum_ref[...], axis=0, keepdims=True)
    s2 = jnp.sum(psq_ref[...], axis=0, keepdims=True)
    mean = s1 * inv_cnt
    var = jnp.maximum(s2 * inv_cnt - mean * mean, 0.0)
    scale = g_ref[...] * jax.lax.rsqrt(var + EPS)
    shift = b_ref[...] - mean * scale
    out = y_ref[...].astype(jnp.float32) * scale + shift
    out = out + r_ref[...].astype(jnp.float32)
    if relu:
        out = jnp.maximum(out, 0.0)
    o_ref[...] = out.astype(o_ref.dtype)


def bn_apply(y, psum, psq, gamma, beta, residual=None, relu=False,
             out_dtype=jnp.bfloat16):
    """Train-mode BN normalize (+residual add) (+ReLU), tiled over M."""
    M, C = y.shape
    tmb, Mp = _choose_row_tile(M, C, 16)
    pad = Mp != M
    y_p = jnp.pad(y, ((0, Mp - M), (0, 0))) if pad else y
    g = gamma.reshape(1, C).astype(jnp.float32)
    b = beta.reshape(1, C).astype(jnp.float32)
    R = psum.shape[0]
    # Each of the 8 sublane rows per partial block carries the full partial
    # sum, hence the extra factor of 8 in the normalizer.
    inv_cnt = 1.0 / (8.0 * M)

    tile = pl.BlockSpec((tmb, C), lambda i: (i, 0))
    stat = pl.BlockSpec((R, C), lambda i: (0, 0))
    vec = pl.BlockSpec((1, C), lambda i: (0, 0))

    if residual is None:
        kern = partial(_bn_apply_kernel, inv_cnt=inv_cnt, relu=relu)
        in_specs = [tile, stat, stat, vec, vec]
        args = (y_p, psum, psq, g, b)
    else:
        r = residual.astype(jnp.bfloat16)
        r_p = jnp.pad(r, ((0, Mp - M), (0, 0))) if pad else r
        kern = partial(_bn_apply_res_kernel, inv_cnt=inv_cnt, relu=relu)
        in_specs = [tile, stat, stat, vec, vec, tile]
        args = (y_p, psum, psq, g, b, r_p)

    out = pl.pallas_call(
        kern,
        out_shape=jax.ShapeDtypeStruct((Mp, C), out_dtype),
        grid=(Mp // tmb,),
        in_specs=in_specs,
        out_specs=tile,
        compiler_params=_cparams("parallel"),
    )(*args)
    return out[:M] if pad else out


def _maxpool_kernel(*refs):
    o_ref = refs[-1]
    m = refs[0][...]
    for r in refs[1:-1]:
        m = jnp.maximum(m, r[...])
    o_ref[...] = m


def _avgpool_fc_kernel(x_ref, w_ref, b_ref, o_ref):
    pooled = jnp.mean(x_ref[...].astype(jnp.float32), axis=1)   # (tb, C)
    o_ref[...] = jnp.dot(pooled.astype(jnp.bfloat16), w_ref[...],
                         preferred_element_type=jnp.float32) + b_ref[...]


# ------------------------------ JAX glue (im2col etc.) -----------------------

def _im2col(x, kh, kw, stride, pad):
    """x: (N, H, W, C) -> patches (N*Ho*Wo, kh*kw*C)."""
    if pad > 0:
        x = jnp.pad(x, ((0, 0), (pad, pad), (pad, pad), (0, 0)))
    N, Hp, Wp, C = x.shape
    Ho = (Hp - kh) // stride + 1
    Wo = (Wp - kw) // stride + 1
    cols = []
    for i in range(kh):
        for j in range(kw):
            cols.append(x[:, i:i + stride * (Ho - 1) + 1:stride,
                          j:j + stride * (Wo - 1) + 1:stride, :])
    patches = jnp.concatenate(cols, axis=-1)
    return patches.reshape(N * Ho * Wo, kh * kw * C), (N, Ho, Wo)


def conv2d(x_nhwc, w, stride, padding):
    """Conv (no bias) as im2col + fused Pallas matmul + BN stats."""
    kh, kw, cin, cout = w.shape
    x_nhwc = x_nhwc.astype(jnp.bfloat16)
    if kh == 1 and kw == 1 and padding == 0:
        if stride > 1:
            x_nhwc = x_nhwc[:, ::stride, ::stride, :]
        N, Ho, Wo, _ = x_nhwc.shape
        patches = x_nhwc.reshape(N * Ho * Wo, cin)
    else:
        patches, (N, Ho, Wo) = _im2col(x_nhwc, kh, kw, stride, padding)
    y, psum, psq = matmul_bn_stats(patches, w.reshape(kh * kw * cin, cout))
    return y, psum, psq, (N, Ho, Wo)


def maxpool_3x3_s2(x):
    """nn.MaxPool2d(kernel_size=3, stride=2, padding=1) in NHWC, tiled over M."""
    N, H, W, C = x.shape
    Ho = (H + 2 - 3) // 2 + 1
    Wo = (W + 2 - 3) // 2 + 1
    xp = jnp.pad(x, ((0, 0), (1, 1), (1, 1), (0, 0)),
                 constant_values=-jnp.inf)
    M2 = N * Ho * Wo
    wins = [xp[:, i:i + 2 * (Ho - 1) + 1:2, j:j + 2 * (Wo - 1) + 1:2, :]
            .reshape(M2, C) for i in range(3) for j in range(3)]
    tmb, Mp = _choose_row_tile(M2, C, 24)
    if Mp != M2:
        wins = [jnp.pad(w_, ((0, Mp - M2), (0, 0))) for w_ in wins]
    tile = pl.BlockSpec((tmb, C), lambda i: (i, 0))
    out = pl.pallas_call(
        _maxpool_kernel,
        out_shape=jax.ShapeDtypeStruct((Mp, C), x.dtype),
        grid=(Mp // tmb,),
        in_specs=[tile] * 9,
        out_specs=tile,
        compiler_params=_cparams("parallel"),
    )(*wins)
    if Mp != M2:
        out = out[:M2]
    return out.reshape(N, Ho, Wo, C)


def _choose_batch_tile(N, HW, C):
    budget = max(8, (8 * 1024 * 1024) // max(HW * C * 2, 1))
    for t in (256, 128, 64, 32, 16, 8):
        if t <= budget and N % t == 0:
            return t
    return N


def avgpool_fc(x_nhwc, w, b):
    """AdaptiveAvgPool2d((1,1)) + flatten + Linear, batch-tiled Pallas kernel."""
    N, H, W, C = x_nhwc.shape
    HW = H * W
    x3 = x_nhwc.reshape(N, HW, C).astype(jnp.bfloat16)
    ncls = w.shape[1]
    tb = _choose_batch_tile(N, HW, C)
    return pl.pallas_call(
        _avgpool_fc_kernel,
        out_shape=jax.ShapeDtypeStruct((N, ncls), jnp.float32),
        grid=(N // tb,),
        in_specs=[pl.BlockSpec((tb, HW, C), lambda i: (i, 0, 0)),
                  pl.BlockSpec((C, ncls), lambda i: (0, 0)),
                  pl.BlockSpec((1, ncls), lambda i: (0, 0))],
        out_specs=pl.BlockSpec((tb, ncls), lambda i: (i, 0)),
        compiler_params=_cparams("parallel"),
    )(x3, w.astype(jnp.bfloat16), b.astype(jnp.float32))


# ------------------------------ Residual blocks ------------------------------

def _identity_or_downsample(x_nhwc, blk, stride):
    N, H, W, Cin = x_nhwc.shape
    if 'ds_conv' in blk:
        y, ps, pq, _ = conv2d(x_nhwc, blk['ds_conv'], stride, 0)
        return bn_apply(y, ps, pq, blk['ds_bn_g'], blk['ds_bn_b'], relu=False)
    return x_nhwc.reshape(N * H * W, Cin)


def basic_block_forward(x_nhwc, blk):
    stride = blk['stride']
    y, ps, pq, (n, h, w) = conv2d(x_nhwc, blk['conv1'], stride, 1)
    y = bn_apply(y, ps, pq, blk['bn1_g'], blk['bn1_b'], relu=True)
    y = y.reshape(n, h, w, -1)
    y, ps, pq, (n, h, w) = conv2d(y, blk['conv2'], 1, 1)
    idn = _identity_or_downsample(x_nhwc, blk, stride)
    out = bn_apply(y, ps, pq, blk['bn2_g'], blk['bn2_b'],
                   residual=idn, relu=True)
    return out.reshape(n, h, w, -1)


def bottleneck_forward(x_nhwc, blk):
    stride = blk['stride']
    y, ps, pq, (n, h, w) = conv2d(x_nhwc, blk['conv1'], 1, 0)
    y = bn_apply(y, ps, pq, blk['bn1_g'], blk['bn1_b'], relu=True)
    y = y.reshape(n, h, w, -1)
    y, ps, pq, (n, h, w) = conv2d(y, blk['conv2'], stride, 1)
    y = bn_apply(y, ps, pq, blk['bn2_g'], blk['bn2_b'], relu=True)
    y = y.reshape(n, h, w, -1)
    y, ps, pq, (n, h, w) = conv2d(y, blk['conv3'], 1, 0)
    idn = _identity_or_downsample(x_nhwc, blk, stride)
    out = bn_apply(y, ps, pq, blk['bn3_g'], blk['bn3_b'],
                   residual=idn, relu=True)
    return out.reshape(n, h, w, -1)


# ------------------------------ Parameter init -------------------------------

def _kaiming_conv(key, kh, kw, cin, cout):
    # kaiming_normal_(mode='fan_out', nonlinearity='relu'): std = sqrt(2/fan_out)
    fan_out = cout * kh * kw
    std = math.sqrt(2.0 / fan_out)
    w = std * jax.random.normal(key, (kh, kw, cin, cout), jnp.float32)
    return w.astype(jnp.bfloat16)


def init_resnet_params(key, block, layers, num_classes=1000):
    expansion = 1 if block == 'basic' else 4
    keys = iter(jax.random.split(key, 256))
    params = {'block': block}
    params['conv1'] = _kaiming_conv(next(keys), 7, 7, 3, 64)
    params['bn1_g'] = jnp.ones((64,), jnp.float32)
    params['bn1_b'] = jnp.zeros((64,), jnp.float32)
    inplanes = 64
    params['layers'] = []
    for planes, nblocks, stride in zip((64, 128, 256, 512), layers, (1, 2, 2, 2)):
        layer = []
        for bi in range(nblocks):
            s = stride if bi == 0 else 1
            blk = {'stride': s}
            if block == 'basic':
                out_ch = planes
                blk['conv1'] = _kaiming_conv(next(keys), 3, 3, inplanes, planes)
                blk['bn1_g'] = jnp.ones((planes,), jnp.float32)
                blk['bn1_b'] = jnp.zeros((planes,), jnp.float32)
                blk['conv2'] = _kaiming_conv(next(keys), 3, 3, planes, planes)
                blk['bn2_g'] = jnp.ones((planes,), jnp.float32)
                blk['bn2_b'] = jnp.zeros((planes,), jnp.float32)
            else:
                width = planes  # groups=1, base_width=64
                out_ch = planes * 4
                blk['conv1'] = _kaiming_conv(next(keys), 1, 1, inplanes, width)
                blk['bn1_g'] = jnp.ones((width,), jnp.float32)
                blk['bn1_b'] = jnp.zeros((width,), jnp.float32)
                blk['conv2'] = _kaiming_conv(next(keys), 3, 3, width, width)
                blk['bn2_g'] = jnp.ones((width,), jnp.float32)
                blk['bn2_b'] = jnp.zeros((width,), jnp.float32)
                blk['conv3'] = _kaiming_conv(next(keys), 1, 1, width, out_ch)
                blk['bn3_g'] = jnp.ones((out_ch,), jnp.float32)
                blk['bn3_b'] = jnp.zeros((out_ch,), jnp.float32)
            if bi == 0 and (s != 1 or inplanes != out_ch):
                blk['ds_conv'] = _kaiming_conv(next(keys), 1, 1, inplanes, out_ch)
                blk['ds_bn_g'] = jnp.ones((out_ch,), jnp.float32)
                blk['ds_bn_b'] = jnp.zeros((out_ch,), jnp.float32)
            layer.append(blk)
            inplanes = out_ch
        params['layers'].append(layer)
    feat = 512 * expansion
    k1, k2 = jax.random.split(next(keys))
    bound = 1.0 / math.sqrt(feat)
    params['fc_w'] = jax.random.uniform(k1, (feat, num_classes), jnp.float32,
                                        -bound, bound)
    params['fc_b'] = jax.random.uniform(k2, (1, num_classes), jnp.float32,
                                        -bound, bound)
    return params


# ------------------------------ Full forward ---------------------------------

def resnet_forward(params, x_nchw):
    block_fwd = (basic_block_forward if params['block'] == 'basic'
                 else bottleneck_forward)
    x = jnp.transpose(x_nchw, (0, 2, 3, 1)).astype(jnp.bfloat16)  # NCHW -> NHWC
    y, ps, pq, (n, h, w) = conv2d(x, params['conv1'], 2, 3)
    y = bn_apply(y, ps, pq, params['bn1_g'], params['bn1_b'], relu=True)
    x = y.reshape(n, h, w, -1)
    x = maxpool_3x3_s2(x)
    for layer in params['layers']:
        for blk in layer:
            x = block_fwd(x, blk)
    return avgpool_fc(x, params['fc_w'], params['fc_b'])


if __name__ == "__main__":
    key = jax.random.PRNGKey(0)
    kp, kx = jax.random.split(key)
    # Small ResNet config: BasicBlock, layers=[1,1,1,1], 10 classes, 32x32 input.
    params = init_resnet_params(kp, 'basic', [1, 1, 1, 1], num_classes=10)
    x = jax.random.normal(kx, (2, 3, 32, 32), jnp.float32)  # NCHW like PyTorch
    logits = resnet_forward(params, x)
    logits = jax.block_until_ready(logits)
    assert logits.shape == (2, 10)
    assert bool(jnp.all(jnp.isfinite(logits)))
    print("KERNEL_OK")
</pallas_src>

<mosaic_0001>
module attributes {stable_mosaic.version = 11 : i64} {
  func.func @_mm_stats_kernel(%arg0: i32, %arg1: i32, %arg2: i32, %arg3: memref<512x147xbf16, #tpu.memory_space<vmem>>, %arg4: memref<147x64xbf16, #tpu.memory_space<vmem>>, %arg5: memref<512x64xbf16, #tpu.memory_space<vmem>>, %arg6: memref<8x64xf32, #tpu.memory_space<vmem>>, %arg7: memref<8x64xf32, #tpu.memory_space<vmem>>) attributes {dimension_semantics = [#tpu.dimension_semantics<parallel>, #tpu.dimension_semantics<parallel>, #tpu.dimension_semantics<arbitrary>], iteration_bounds = array<i64: 1, 1, 1>, scalar_prefetch = 0 : i64, scratch_operands = 0 : i64, tpu.core_type = #tpu.core_type<tc>, window_params = [{transform_indices = @transform_0, window_bounds = array<i64: 512, 147>}, {transform_indices = @transform_1, window_bounds = array<i64: 147, 64>}, {transform_indices = @transform_2, window_bounds = array<i64: 512, 64>}, {transform_indices = @transform_3, window_bounds = array<i64: 8, 64>}, {transform_indices = @transform_4, window_bounds = array<i64: 8, 64>}]} {
    %c0_i32 = arith.constant 0 : i32
    %0 = arith.cmpi eq, %arg2, %c0_i32 : i32
    %1 = arith.extui %0 : i1 to i32
    %c0_i32_0 = arith.constant 0 : i32
    %2 = arith.cmpi ne, %1, %c0_i32_0 : i32
    scf.if %2 {
      %cst_16 = arith.constant 0.000000e+00 : f32
      %23 = vector.broadcast %cst_16 : f32 to vector<8x64xf32>
      %c0_17 = arith.constant 0 : index
      %c0_18 = arith.constant 0 : index
      %24 = vector.load %arg6[%c0_17, %c0_18] : memref<8x64xf32, #tpu.memory_space<vmem>>, vector<8x64xf32>
      tpu.vector_store %arg6[%c0_17, %c0_18], %23 {strides = array<i32>} : memref<8x64xf32, #tpu.memory_space<vmem>>, vector<8x64xf32>,
      %cst_19 = arith.constant 0.000000e+00 : f32
      %25 = vector.broadcast %cst_19 : f32 to vector<8x64xf32>
      %c0_20 = arith.constant 0 : index
      %c0_21 = arith.constant 0 : index
      %26 = vector.load %arg7[%c0_20, %c0_21] : memref<8x64xf32, #tpu.memory_space<vmem>>, vector<8x64xf32>
      tpu.vector_store %arg7[%c0_20, %c0_21], %25 {strides = array<i32>} : memref<8x64xf32, #tpu.memory_space<vmem>>, vector<8x64xf32>,
    } else {
    }
    %c0 = arith.constant 0 : index
    %c0_1 = arith.constant 0 : index
    %3 = vector.load %arg3[%c0, %c0_1] : memref<512x147xbf16, #tpu.memory_space<vmem>>, vector<512x147xbf16>
    %c0_2 = arith.constant 0 : index
    %c0_3 = arith.constant 0 : index
    %4 = vector.load %arg4[%c0_2, %c0_3] : memref<147x64xbf16, #tpu.memory_space<vmem>>, vector<147x64xbf16>
    %cst = arith.constant dense<0.000000e+00> : vector<512x64xf32>
    %5 = tpu.matmul %3, %4, %cst {dimension_numbers = #tpu.dot_dimension_numbers<[1], [0], [0], [1], [0, 0, 1, 1], [], []>} : vector<512x147xbf16>, vector<147x64xbf16>, vector<512x64xf32> -> vector<512x64xf32>
    %6 = arith.truncf %5 : vector<512x64xf32> to vector<512x64xbf16>
    %c0_4 = arith.constant 0 : index
    %c0_5 = arith.constant 0 : index
    %7 = vector.load %arg5[%c0_4, %c0_5] : memref<512x64xbf16, #tpu.memory_space<vmem>>, vector<512x64xbf16>
    tpu.vector_store %arg5[%c0_4, %c0_5], %6 {strides = array<i32>} : memref<512x64xbf16, #tpu.memory_space<vmem>>, vector<512x64xbf16>,
    %cst_6 = arith.constant dense<0.000000e+00> : vector<64xf32>
    %8 = vector.multi_reduction <add>, %5, %cst_6 [0] : vector<512x64xf32> to vector<64xf32>
    %9 = vector.shape_cast %8 : vector<64xf32> to vector<1x64xf32>
    %10 = arith.mulf %5, %5 : vector<512x64xf32>
    %cst_7 = arith.constant dense<0.000000e+00> : vector<64xf32>
    %11 = vector.multi_reduction <add>, %10, %cst_7 [0] : vector<512x64xf32> to vector<64xf32>
    %12 = vector.shape_cast %11 : vector<64xf32> to vector<1x64xf32>
    %c0_8 = arith.constant 0 : index
    %c0_9 = arith.constant 0 : index
    %13 = vector.load %arg6[%c0_8, %c0_9] : memref<8x64xf32, #tpu.memory_space<vmem>>, vector<8x64xf32>
    %14 = vector.shape_cast %9 : vector<1x64xf32> to vector<1x64xf32>
    %15 = vector.broadcast %14 : vector<1x64xf32> to vector<8x64xf32>
    %16 = arith.addf %13, %15 : vector<8x64xf32>
    %c0_10 = arith.constant 0 : index
    %c0_11 = arith.constant 0 : index
    %17 = vector.load %arg6[%c0_10, %c0_11] : memref<8x64xf32, #tpu.memory_space<vmem>>, vector<8x64xf32>
    tpu.vector_store %arg6[%c0_10, %c0_11], %16 {strides = array<i32>} : memref<8x64xf32, #tpu.memory_space<vmem>>, vector<8x64xf32>,
    %c0_12 = arith.constant 0 : index
    %c0_13 = arith.constant 0 : index
    %18 = vector.load %arg7[%c0_12, %c0_13] : memref<8x64xf32, #tpu.memory_space<vmem>>, vector<8x64xf32>
    %19 = vector.shape_cast %12 : vector<1x64xf32> to vector<1x64xf32>
    %20 = vector.broadcast %19 : vector<1x64xf32> to vector<8x64xf32>
    %21 = arith.addf %18, %20 : vector<8x64xf32>
    %c0_14 = arith.constant 0 : index
    %c0_15 = arith.constant 0 : index
    %22 = vector.load %arg7[%c0_14, %c0_15] : memref<8x64xf32, #tpu.memory_space<vmem>>, vector<8x64xf32>
    tpu.vector_store %arg7[%c0_14, %c0_15], %21 {strides = array<i32>} : memref<8x64xf32, #tpu.memory_space<vmem>>, vector<8x64xf32>,
    return
  }
  func.func @transform_0(%arg0: i32, %arg1: i32, %arg2: i32) -> (i32, i32) {
    %c1_i32 = arith.constant 1 : i32
    %0 = arith.muli %arg0, %c1_i32 : i32
    %1 = arith.addi %0, %arg2 : i32
    %c0_i32 = arith.constant 0 : i32
    %c0_i32_0 = arith.constant 0 : i32
    return %1, %c0_i32 : i32, i32
  }
  func.func @transform_1(%arg0: i32, %arg1: i32, %arg2: i32) -> (i32, i32) {
    %c0_i32 = arith.constant 0 : i32
    %c0_i32_0 = arith.constant 0 : i32
    return %c0_i32, %arg1 : i32, i32
  }
  func.func @transform_2(%arg0: i32, %arg1: i32, %arg2: i32) -> (i32, i32) {
    %c1_i32 = arith.constant 1 : i32
    %0 = arith.muli %arg0, %c1_i32 : i32
    %1 = arith.addi %0, %arg2 : i32
    %c0_i32 = arith.constant 0 : i32
    return %1, %arg1 : i32, i32
  }
  func.func @transform_3(%arg0: i32, %arg1: i32, %arg2: i32) -> (i32, i32) {
    %c0_i32 = arith.constant 0 : i32
    return %arg0, %arg1 : i32, i32
  }
  func.func @transform_4(%arg0: i32, %arg1: i32, %arg2: i32) -> (i32, i32) {
    %c0_i32 = arith.constant 0 : i32
    return %arg0, %arg1 : i32, i32
  }
}

</mosaic_0001>

<llo_original>
// kernel: tpu_custom_call.1
$region0: #{tpu_custom_call.1}
  #allocation0 [shape = 'u32[]', space=smem, size = 0x4, offset = 0x4, fixed_abs, tag = 'smem constant byte address 0x4 - core index']
  #allocation1 [shape = 'u32[144,128]{1,0:T(1,128)}', space=vmem, size = 0x12000, scoped, tag = 'internal scratch']
  %s0 = inlined_call_operand.hbm [shape: bf16[512,147], index: 0, kind: input, shape index: {}]
  %s1 = inlined_call_operand.hbm [shape: bf16[147,64], index: 1, kind: input, shape index: {}]
  %s2 = inlined_call_operand.hbm [shape: bf16[512,64], index: 2, kind: output, shape index: {0}]
  %s3 = inlined_call_operand.hbm [shape: f32[8,64], index: 3, kind: output, shape index: {1}]
  %s4 = inlined_call_operand.hbm [shape: f32[8,64], index: 4, kind: output, shape index: {2}]
  %5 = xla_tuple %s2, %s3, %s4
  %s6 = sld [smem:[#allocation0]]
  $region46: #{tpu_custom_call.1} parent=0
    _
  %s8 = ssub.s32 1, %s6
  %s9 = scalar_select 0, %s8, %s6
  $region1: #{tpu_custom_call.1} parent=0
    #allocation2 [shape = 'u8[262144]{0}', space=vmem, size = 0x40000, scoped, tag = 'input window, operand 0, single buffered']
    #allocation3 [shape = 's32[1]{0}', space=sflag, size = 0x4, scoped, tag = 'scoped memory for tpu_custom_call.1']
    #allocation4 [shape = 's32[1]{0}', space=sflag, size = 0x4, scoped, tag = 'scoped memory for tpu_custom_call.1']
    #allocation5 [shape = 'u8[38912]{0}', space=vmem, size = 0x9800, scoped, tag = 'input window, operand 1, single buffered']
    #allocation6 [shape = 's32[1]{0}', space=sflag, size = 0x4, scoped, tag = 'scoped memory for tpu_custom_call.1']
    #allocation7 [shape = 'u8[131072]{0}', space=vmem, size = 0x20000, scoped, tag = 'output window, operand 0, single buffered']
    #allocation8 [shape = 'u8[4096]{0}', space=vmem, size = 0x1000, scoped, tag = 'output window, operand 1, single buffered']
    #allocation9 [shape = 's32[1]{0}', space=sflag, size = 0x4, scoped, tag = 'scoped memory for tpu_custom_call.1']
    #allocation10 [shape = 'u8[4096]{0}', space=vmem, size = 0x1000, scoped, tag = 'output window, operand 2, single buffered']
    %10 = vsyncpa [#allocation3], 0
    %11 = vsyncpa [#allocation6], 0
    %12 = vsyncpa [#allocation4], 0
    %13 = vsyncpa [#allocation9], 0
    // Predicated region
    $region2: #{tpu_custom_call.1} parent=1 // pred_check
      _
    $region3: #{tpu_custom_call.1} parent=1 // pred_check_branch
      %15 = sbr.rel (0) target = $region5
    $region4: #{tpu_custom_call.1} parent=1 // pred_region
      %s16 = sadd.s32 0, 0
      %s17 = smul.u32 64, %s16
      %s19 = ssub.s32 8192, 8192
      %20 = vsyncadd [#allocation3], %s19
      %s21 = smul.addr %s17, 2
      %s22 = smul.addr %s21, 64
      %s23 = scalar_lea.hbm %s0, %s22
      %s24 = sshll.u32 [#allocation2], 4
      %s25 = int_to_ptr.vmem [resolvable:$true] %s24
      %30 = dma.hbm_to_vmem [thread:$0]  %s23, 8192, %s25, [#allocation3], 128, 128, 8
    $region5: #{tpu_custom_call.1} parent=1 // pred_fallthru
      _
    // Predicated region
    $region6: #{tpu_custom_call.1} parent=1 // pred_check
      _
    $region7: #{tpu_custom_call.1} parent=1 // pred_check_branch
      %32 = sbr.rel (0) target = $region9
    $region8: #{tpu_custom_call.1} parent=1 // pred_region
      %s34 = ssub.s32 1216, 1216
      %35 = vsyncadd [#allocation6], %s34
      %s36 = sshll.u32 [#allocation5], 4
      %s37 = int_to_ptr.vmem [resolvable:$true] %s36
      %42 = dma.hbm_to_vmem [thread:$0]  %s1, 1216, %s37, [#allocation6], 64, 64, 4
    $region9: #{tpu_custom_call.1} parent=1 // pred_fallthru
      _
    // Predicated region
    $region10: #{tpu_custom_call.1} parent=1 // pred_check
      _
    $region11: #{tpu_custom_call.1} parent=1 // pred_check_branch
      %44 = sbr.rel (0) target = $region13
    $region12: #{tpu_custom_call.1} parent=1 // pred_region
      %45 = dma.done [#allocation3], 8192
    $region13: #{tpu_custom_call.1} parent=1 // pred_fallthru
      _
    // Predicated region
    $region14: #{tpu_custom_call.1} parent=1 // pred_check
      _
    $region15: #{tpu_custom_call.1} parent=1 // pred_check_branch
      %47 = sbr.rel (0) target = $region17
    $region16: #{tpu_custom_call.1} parent=1 // pred_region
      %48 = dma.done [#allocation6], 1216
    $region17: #{tpu_custom_call.1} parent=1 // pred_fallthru
      _
    %s49 = sadd.s32 0, 0
    %s50 = smul.u32 64, %s49
    %s51 = sadd.s32 0, 0
    %s52 = smul.u32 64, %s51
    %p54 = scmp.eq.s32.totalorder 0, 0
    // Predicated region
    $region18: #{tpu_custom_call.1} parent=1 // pred_check
      %p55 = pneg %p54
    $region19: #{tpu_custom_call.1} parent=1 // pred_check_branch
      %57 = sbr.rel (%p55) target = $region21
    $region20: #{tpu_custom_call.1} parent=1 // pred_region
      %vm58 = vcmask 523264
      %59 = vst.msk [vmem:[#allocation8] sm:$0xff] %vm58, 0.0
      %60 = vst.msk [vmem:[#allocation10] sm:$0xff] %vm58, 0.0
    $region21: #{tpu_custom_call.1} parent=1 // pred_fallthru
      _
    %v61 = vld [vmem:[#allocation2] sm:$0xff]
    %v62 = vld [vmem:[#allocation2 + $0x8] sm:$0xff]
    %v63 = vld [vmem:[#allocation2 + $0x10] sm:$0xff]
    %v64 = vld [vmem:[#allocation2 + $0x18] sm:$0xff]
    %v65 = vld [vmem:[#allocation2 + $0x20] sm:$0xff]
    %v66 = vld [vmem:[#allocation2 + $0x28] sm:$0xff]
    %v67 = vld [vmem:[#allocation2 + $0x30] sm:$0xff]
    %v68 = vld [vmem:[#allocation2 + $0x38] sm:$0xff]
    %v69 = vld [vmem:[#allocation2 + $0x40] sm:$0xff]
    %v70 = vld [vmem:[#allocation2 + $0x48] sm:$0xff]
    %v71 = vld [vmem:[#allocation2 + $0x50] sm:$0xff]
    %v72 = vld [vmem:[#allocation2 + $0x58] sm:$0xff]
    %v73 = vld [vmem:[#allocation2 + $0x60] sm:$0xff]
    %v74 = vld [vmem:[#allocation2 + $0x68] sm:$0xff]
    %v75 = vld [vmem:[#allocation2 + $0x70] sm:$0xff]
    %v76 = vld [vmem:[#allocation2 + $0x78] sm:$0xff]
    %v77 = vld [vmem:[#allocation2 + $0x80] sm:$0xff]
    %v78 = vld [vmem:[#allocation2 + $0x88] sm:$0xff]
    %v79 = vld [vmem:[#allocation2 + $0x90] sm:$0xff]
    %v80 = vld [vmem:[#allocation2 + $0x98] sm:$0xff]
    %v81 = vld [vmem:[#allocation2 + $0xa0] sm:$0xff]
    %v82 = vld [vmem:[#allocation2 + $0xa8] sm:$0xff]
    %v83 = vld [vmem:[#allocation2 + $0xb0] sm:$0xff]
    %v84 = vld [vmem:[#allocation2 + $0xb8] sm:$0xff]
    %v85 = vld [vmem:[#allocation2 + $0xc0] sm:$0xff]
    %v86 = vld [vmem:[#allocation2 + $0xc8] sm:$0xff]
    %v87 = vld [vmem:[#allocation2 + $0xd0] sm:$0xff]
    %v88 = vld [vmem:[#allocation2 + $0xd8] sm:$0xff]
    %v89 = vld [vmem:[#allocation2 + $0xe0] sm:$0xff]
    %v90 = vld [vmem:[#allocation2 + $0xe8] sm:$0xff]
    %v91 = vld [vmem:[#allocation2 + $0xf0] sm:$0xff]
    %v92 = vld [vmem:[#allocation2 + $0xf8] sm:$0xff]
    %v93 = vld [vmem:[#allocation2 + $0x100] sm:$0xff]
    %v94 = vld [vmem:[#allocation2 + $0x108] sm:$0xff]
    %v95 = vld [vmem:[#allocation2 + $0x110] sm:$0xff]
    %v96 = vld [vmem:[#allocation2 + $0x118] sm:$0xff]
    %v97 = vld [vmem:[#allocation2 + $0x120] sm:$0xff]
    %v98 = vld [vmem:[#allocation2 + $0x128] sm:$0xff]
    %v99 = vld [vmem:[#allocation2 + $0x130] sm:$0xff]
    %v100 = vld [vmem:[#allocation2 + $0x138] sm:$0xff]
    %v101 = vld [vmem:[#allocation2 + $0x140] sm:$0xff]
    %v102 = vld [vmem:[#allocation2 + $0x148] sm:$0xff]
    %v103 = vld [vmem:[#allocation2 + $0x150] sm:$0xff]
    %v104 = vld [vmem:[#allocation2 + $0x158] sm:$0xff]
    %v105 = vld [vmem:[#allocation2 + $0x160] sm:$0xff]
    %v106 = vld [vmem:[#allocation2 + $0x168] sm:$0xff]
    %v107 = vld [vmem:[#allocation2 + $0x170] sm:$0xff]
    %v108 = vld [vmem:[#allocation2 + $0x178] sm:$0xff]
    %v109 = vld [vmem:[#allocation2 + $0x180] sm:$0xff]
    %v110 = vld [vmem:[#allocation2 + $0x188] sm:$0xff]
    %v111 = vld [vmem:[#allocation2 + $0x190] sm:$0xff]
    %v112 = vld [vmem:[#allocation2 + $0x198] sm:$0xff]
    %v113 = vld [vmem:[#allocation2 + $0x1a0] sm:$0xff]
    %v114 = vld [vmem:[#allocation2 + $0x1a8] sm:$0xff]
    %v115 = vld [vmem:[#allocation2 + $0x1b0] sm:$0xff]
    %v116 = vld [vmem:[#allocation2 + $0x1b8] sm:$0xff]
    %v117 = vld [vmem:[#allocation2 + $0x1c0] sm:$0xff]
    %v118 = vld [vmem:[#allocation2 + $0x1c8] sm:$0xff]
    %v119 = vld [vmem:[#allocation2 + $0x1d0] sm:$0xff]
    %v120 = vld [vmem:[#allocation2 + $0x1d8] sm:$0xff]
    %v121 = vld [vmem:[#allocation2 + $0x1e0] sm:$0xff]
    %v122 = vld [vmem:[#allocation2 + $0x1e8] sm:$0xff]
    %v123 = vld [vmem:[#allocation2 + $0x1f0] sm:$0xff]
    %v124 = vld [vmem:[#allocation2 + $0x1f8] sm:$0xff]
    %v125 = vld [vmem:[#allocation5] sm:$0xf]
    %v126 = vld [vmem:[#allocation5 + $0x4] sm:$0xf]
    %v127 = vld [vmem:[#allocation5 + $0x8] sm:$0xf]
    %v128 = vld [vmem:[#allocation5 + $0xc] sm:$0xf]
    %v129 = vld [vmem:[#allocation5 + $0x10] sm:$0xf]
    %v130 = vld [vmem:[#allocation5 + $0x14] sm:$0xf]
    %v131 = vld [vmem:[#allocation5 + $0x18] sm:$0xf]
    %v132 = vld [vmem:[#allocation5 + $0x1c] sm:$0xf]
    %v133 = vld [vmem:[#allocation5 + $0x20] sm:$0xf]
    %v134 = vld [vmem:[#allocation5 + $0x24] sm:$0xf]
    %v135 = vld [vmem:[#allocation5 + $0x28] sm:$0xf]
    %v136 = vld [vmem:[#allocation5 + $0x2c] sm:$0xf]
    %v137 = vld [vmem:[#allocation5 + $0x30] sm:$0xf]
    %v138 = vld [vmem:[#allocation5 + $0x34] sm:$0xf]
    %v139 = vld [vmem:[#allocation5 + $0x38] sm:$0xf]
    %v140 = vld [vmem:[#allocation5 + $0x3c] sm:$0xf]
    %v141 = vld [vmem:[#allocation5 + $0x40] sm:$0xf]
    %v142 = vld [vmem:[#allocation5 + $0x44] sm:$0xf]
    %v143 = vld [vmem:[#allocation5 + $0x48] sm:$0x3]
    %v208 = vunpack.c.l.b16 %v61
    %v209 = vunpack.c.h.b16 %v61
    %v210 = vunpack.c.l.b16 %v62
    %v211 = vunpack.c.h.b16 %v62
    %v212 = vunpack.c.l.b16 %v63
    %v213 = vunpack.c.h.b16 %v63
    %v214 = vunpack.c.l.b16 %v64
    %v215 = vunpack.c.h.b16 %v64
    %v216 = vunpack.c.l.b16 %v65
    %v217 = vunpack.c.h.b16 %v65
    %v218 = vunpack.c.l.b16 %v66
    %v219 = vunpack.c.h.b16 %v66
    %v220 = vunpack.c.l.b16 %v67
    %v221 = vunpack.c.h.b16 %v67
    %v222 = vunpack.c.l.b16 %v68
    %v223 = vunpack.c.h.b16 %v68
    %v224 = vunpack.c.l.b16 %v69
    %v225 = vunpack.c.h.b16 %v69
    %v226 = vunpack.c.l.b16 %v70
    %v227 = vunpack.c.h.b16 %v70
    %v228 = vunpack.c.l.b16 %v71
    %v229 = vunpack.c.h.b16 %v71
    %v230 = vunpack.c.l.b16 %v72
    %v231 = vunpack.c.h.b16 %v72
    %v232 = vunpack.c.l.b16 %v73
    %v233 = vunpack.c.h.b16 %v73
    %v234 = vunpack.c.l.b16 %v74
    %v235 = vunpack.c.h.b16 %v74
    %v236 = vunpack.c.l.b16 %v75
    %v237 = vunpack.c.h.b16 %v75
    %v238 = vunpack.c.l.b16 %v76
    %v239 = vunpack.c.h.b16 %v76
    %v240 = vunpack.c.l.b16 %v77
    %v241 = vunpack.c.h.b16 %v77
    %v242 = vunpack.c.l.b16 %v78
    %v243 = vunpack.c.h.b16 %v78
    %v244 = vunpack.c.l.b16 %v79
    %v245 = vunpack.c.h.b16 %v79
    %v246 = vunpack.c.l.b16 %v80
    %v247 = vunpack.c.h.b16 %v80
    %v248 = vunpack.c.l.b16 %v81
    %v249 = vunpack.c.h.b16 %v81
    %v250 = vunpack.c.l.b16 %v82
    %v251 = vunpack.c.h.b16 %v82
    %v252 = vunpack.c.l.b16 %v83
    %v253 = vunpack.c.h.b16 %v83
    %v254 = vunpack.c.l.b16 %v84
    %v255 = vunpack.c.h.b16 %v84
    %v256 = vunpack.c.l.b16 %v85
    %v257 = vunpack.c.h.b16 %v85
    %v258 = vunpack.c.l.b16 %v86
    %v259 = vunpack.c.h.b16 %v86
    %v260 = vunpack.c.l.b16 %v87
    %v261 = vunpack.c.h.b16 %v87
    %v262 = vunpack.c.l.b16 %v88
    %v263 = vunpack.c.h.b16 %v88
    %v264 = vunpack.c.l.b16 %v89
    %v265 = vunpack.c.h.b16 %v89
    %v266 = vunpack.c.l.b16 %v90
    %v267 = vunpack.c.h.b16 %v90
    %v268 = vunpack.c.l.b16 %v91
    %v269 = vunpack.c.h.b16 %v91
    %v270 = vunpack.c.l.b16 %v92
    %v271 = vunpack.c.h.b16 %v92
    %v272 = vunpack.c.l.b16 %v93
    %v273 = vunpack.c.h.b16 %v93
    %v274 = vunpack.c.l.b16 %v94
    %v275 = vunpack.c.h.b16 %v94
    %v276 = vunpack.c.l.b16 %v95
    %v277 = vunpack.c.h.b16 %v95
    %v278 = vunpack.c.l.b16 %v96
    %v279 = vunpack.c.h.b16 %v96
    %v280 = vunpack.c.l.b16 %v97
    %v281 = vunpack.c.h.b16 %v97
    %v282 = vunpack.c.l.b16 %v98
    %v283 = vunpack.c.h.b16 %v98
    %v284 = vunpack.c.l.b16 %v99
    %v285 = vunpack.c.h.b16 %v99
    %v286 = vunpack.c.l.b16 %v100
    %v287 = vunpack.c.h.b16 %v100
    %v288 = vunpack.c.l.b16 %v101
    %v289 = vunpack.c.h.b16 %v101
    %v290 = vunpack.c.l.b16 %v102
    %v291 = vunpack.c.h.b16 %v102
    %v292 = vunpack.c.l.b16 %v103
    %v293 = vunpack.c.h.b16 %v103
    %v294 = vunpack.c.l.b16 %v104
    %v295 = vunpack.c.h.b16 %v104
    %v296 = vunpack.c.l.b16 %v105
    %v297 = vunpack.c.h.b16 %v105
    %v298 = vunpack.c.l.b16 %v106
    %v299 = vunpack.c.h.b16 %v106
    %v300 = vunpack.c.l.b16 %v107
    %v301 = vunpack.c.h.b16 %v107
    %v302 = vunpack.c.l.b16 %v108
    %v303 = vunpack.c.h.b16 %v108
    %v304 = vunpack.c.l.b16 %v109
    %v305 = vunpack.c.h.b16 %v109
    %v306 = vunpack.c.l.b16 %v110
    %v307 = vunpack.c.h.b16 %v110
    %v308 = vunpack.c.l.b16 %v111
    %v309 = vunpack.c.h.b16 %v111
    %v310 = vunpack.c.l.b16 %v112
    %v311 = vunpack.c.h.b16 %v112
    %v312 = vunpack.c.l.b16 %v113
    %v313 = vunpack.c.h.b16 %v113
    %v314 = vunpack.c.l.b16 %v114
    %v315 = vunpack.c.h.b16 %v114
    %v316 = vunpack.c.l.b16 %v115
    %v317 = vunpack.c.h.b16 %v115
    %v318 = vunpack.c.l.b16 %v116
    %v319 = vunpack.c.h.b16 %v116
    %v320 = vunpack.c.l.b16 %v117
    %v321 = vunpack.c.h.b16 %v117
    %v322 = vunpack.c.l.b16 %v118
    %v323 = vunpack.c.h.b16 %v118
    %v324 = vunpack.c.l.b16 %v119
    %v325 = vunpack.c.h.b16 %v119
    %v326 = vunpack.c.l.b16 %v120
    %v327 = vunpack.c.h.b16 %v120
    %v328 = vunpack.c.l.b16 %v121
    %v329 = vunpack.c.h.b16 %v121
    %v330 = vunpack.c.l.b16 %v122
    %v331 = vunpack.c.h.b16 %v122
    %v332 = vunpack.c.l.b16 %v123
    %v333 = vunpack.c.h.b16 %v123
    %v334 = vunpack.c.l.b16 %v124
    %v335 = vunpack.c.h.b16 %v124
    %v336 = vpack.c.b16 %v210, %v208
    %v337 = vpack.c.b16 %v211, %v209
    %v338 = vpack.c.b16 %v214, %v212
    %v339 = vpack.c.b16 %v215, %v213
    %v340 = vpack.c.b16 %v218, %v216
    %v341 = vpack.c.b16 %v219, %v217
    %v342 = vpack.c.b16 %v222, %v220
    %v343 = vpack.c.b16 %v223, %v221
    %v344 = vpack.c.b16 %v226, %v224
    %v345 = vpack.c.b16 %v227, %v225
    %v346 = vpack.c.b16 %v230, %v228
    %v347 = vpack.c.b16 %v231, %v229
    %v348 = vpack.c.b16 %v234, %v232
    %v349 = vpack.c.b16 %v235, %v233
    %v350 = vpack.c.b16 %v238, %v236
    %v351 = vpack.c.b16 %v239, %v237
    %v352 = vpack.c.b16 %v242, %v240
    %v353 = vpack.c.b16 %v243, %v241
    %v354 = vpack.c.b16 %v246, %v244
    %v355 = vpack.c.b16 %v247, %v245
    %v356 = vpack.c.b16 %v250, %v248
    %v357 = vpack.c.b16 %v251, %v249
    %v358 = vpack.c.b16 %v254, %v252
    %v359 = vpack.c.b16 %v255, %v253
    %v360 = vpack.c.b16 %v258, %v256
    %v361 = vpack.c.b16 %v259, %v257
    %v362 = vpack.c.b16 %v262, %v260
    %v363 = vpack.c.b16 %v263, %v261
    %v364 = vpack.c.b16 %v266, %v264
    %v365 = vpack.c.b16 %v267, %v265
    %v366 = vpack.c.b16 %v270, %v268
    %v367 = vpack.c.b16 %v271, %v269
    %v368 = vpack.c.b16 %v274, %v272
    %v369 = vpack.c.b16 %v275, %v273
    %v370 = vpack.c.b16 %v278, %v276
    %v371 = vpack.c.b16 %v279, %v277
    %v372 = vpack.c.b16 %v282, %v280
    %v373 = vpack.c.b16 %v283, %v281
    %v374 = vpack.c.b16 %v286, %v284
    %v375 = vpack.c.b16 %v287, %v285
    %v376 = vpack.c.b16 %v290, %v288
    %v377 = vpack.c.b16 %v291, %v289
    %v378 = vpack.c.b16 %v294, %v292
    %v379 = vpack.c.b16 %v295, %v293
    %v380 = vpack.c.b16 %v298, %v296
    %v381 = vpack.c.b16 %v299, %v297
    %v382 = vpack.c.b16 %v302, %v300
    %v383 = vpack.c.b16 %v303, %v301
    %v384 = vpack.c.b16 %v306, %v304
    %v385 = vpack.c.b16 %v307, %v305
    %v386 = vpack.c.b16 %v310, %v308
    %v387 = vpack.c.b16 %v311, %v309
    %v388 = vpack.c.b16 %v314, %v312
    %v389 = vpack.c.b16 %v315, %v313
    %v390 = vpack.c.b16 %v318, %v316
    %v391 = vpack.c.b16 %v319, %v317
    %v392 = vpack.c.b16 %v322, %v320
    %v393 = vpack.c.b16 %v323, %v321
    %v394 = vpack.c.b16 %v326, %v324
    %v395 = vpack.c.b16 %v327, %v325
    %v396 = vpack.c.b16 %v330, %v328
    %v397 = vpack.c.b16 %v331, %v329
    %v398 = vpack.c.b16 %v334, %v332
    %v399 = vpack.c.b16 %v335, %v333
    %v451 = vunpack.c.l.b16 %v125
    %v452 = vunpack.c.l.b16 %v126
    %v453 = vunpack.c.l.b16 %v127
    %v454 = vunpack.c.l.b16 %v128
    %v455 = vunpack.c.l.b16 %v129
    %v456 = vunpack.c.l.b16 %v130
    %v457 = vunpack.c.l.b16 %v131
    %v458 = vunpack.c.l.b16 %v132
    %v459 = vunpack.c.l.b16 %v133
    %v460 = vunpack.c.l.b16 %v134
    %v461 = vunpack.c.l.b16 %v135
    %v462 = vunpack.c.l.b16 %v136
    %v463 = vunpack.c.l.b16 %v137
    %v464 = vunpack.c.l.b16 %v138
    %v465 = vunpack.c.l.b16 %v139
    %v466 = vunpack.c.l.b16 %v140
    %v467 = vunpack.c.l.b16 %v141
    %v468 = vunpack.c.l.b16 %v142
    %v469 = vunpack.c.l.b16 %v143
    %v470 = vpack.c.b16 %v452, %v451
    %v471 = vpack.c.b16 %v454, %v453
    %v472 = vpack.c.b16 %v456, %v455
    %v473 = vpack.c.b16 %v458, %v457
    %v474 = vpack.c.b16 %v460, %v459
    %v475 = vpack.c.b16 %v462, %v461
    %v476 = vpack.c.b16 %v464, %v463
    %v477 = vpack.c.b16 %v466, %v465
    %v478 = vpack.c.b16 %v468, %v467
    %v479 = vpack.c.b16 %v469, %v469
    %vm489 = vcmask 154624
    %v491 = vsel %vm489, %v337, 0
    %v494 = vsel %vm489, %v339, 0
    %v497 = vsel %vm489, %v341, 0
    %v500 = vsel %vm489, %v343, 0
    %v503 = vsel %vm489, %v345, 0
    %v506 = vsel %vm489, %v347, 0
    %v509 = vsel %vm489, %v349, 0
    %v512 = vsel %vm489, %v351, 0
    %v515 = vsel %vm489, %v353, 0
    %v518 = vsel %vm489, %v355, 0
    %v521 = vsel %vm489, %v357, 0
    %v524 = vsel %vm489, %v359, 0
    %v527 = vsel %vm489, %v361, 0
    %v530 = vsel %vm489, %v363, 0
    %v533 = vsel %vm489, %v365, 0
    %v536 = vsel %vm489, %v367, 0
    %v539 = vsel %vm489, %v369, 0
    %v542 = vsel %vm489, %v371, 0
    %v545 = vsel %vm489, %v373, 0
    %v548 = vsel %vm489, %v375, 0
    %v551 = vsel %vm489, %v377, 0
    %v554 = vsel %vm489, %v379, 0
    %v557 = vsel %vm489, %v381, 0
    %v560 = vsel %vm489, %v383, 0
    %v563 = vsel %vm489, %v385, 0
    %v566 = vsel %vm489, %v387, 0
    %v569 = vsel %vm489, %v389, 0
    %v572 = vsel %vm489, %v391, 0
    %v575 = vsel %vm489, %v393, 0
    %v578 = vsel %vm489, %v395, 0
    %v581 = vsel %vm489, %v397, 0
    %v584 = vsel %vm489, %v399, 0
    %vm586 = vcmask 1040384
    %vm587 = vcmask 1041408
    %v588 = vsel %vm586, 4294967295, 65535
    %v589 = vsel %vm587, %v588, 0
    %v591 = vand.u32 %v479, %v589
    %593 = vmatprep.subr.bf16.mxu0 0
    %594 = vmatpush1.bf16.msra.mxu0 %v470
    %595 = vmatprep.subr.bf16.mxu0 0
    %596 = vmatpush1.bf16.msra.mxu0 %v471
    %597 = vmatprep.subr.bf16.mxu0 0
    %598 = vmatpush1.bf16.msra.mxu0 %v472
    %599 = vmatprep.subr.bf16.mxu0 0
    %600 = vmatpush1.bf16.msra.mxu0 %v473
    %601 = vmatprep.subr.bf16.mxu0 0
    %602 = vmatpush1.bf16.msra.mxu0 %v474
    %603 = vmatprep.subr.bf16.mxu0 0
    %604 = vmatpush1.bf16.msra.mxu0 %v475
    %605 = vmatprep.subr.bf16.mxu0 0
    %606 = vmatpush1.bf16.msra.mxu0 %v476
    %607 = vmatprep.subr.bf16.mxu0 0
    %608 = vmatpush1.bf16.msra.mxu0 %v477
    %609 = vmatprep.subr.bf16.mxu0 0
    %610 = vmatpush1.bf16.msra.mxu0 %v478
    %611 = vmatprep.subr.bf16.mxu0 0
    %612 = vmatpush1.bf16.msra.mxu0 %v591
    %613 = vmatprep.subr.bf16.mxu0 0
    %614 = vmatpush1.bf16.msra.mxu0 0
    %615 = vmatprep.subr.bf16.mxu0 0
    %616 = vmatpush1.bf16.msra.mxu0 0
    %617 = vmatprep.subr.bf16.mxu0 0
    %618 = vmatpush1.bf16.msra.mxu0 0
    %619 = vmatprep.subr.bf16.mxu0 0
    %620 = vmatpush1.bf16.msra.mxu0 0
    %621 = vmatprep.subr.bf16.mxu0 0
    %622 = vmatpush1.bf16.msra.mxu0 0
    %623 = vmatprep.subr.bf16.mxu0 0
    %624 = vmatpush1.bf16.msra.mxu0 0
    %625 = vmatprep.mubr.bf16.mxu0 %v491
    %626 = vmatmul.mubr.bf16.gmra.mrb[0].mxu0 %v336
    %v627 = vpop.f32.mrb[0].mxu0
    %v628 = vadd.f32 0.0, %v627
    %v629 = vpop.f32.mrb[0].mxu0
    %v630 = vpop.f32.mrb[0].mxu0
    %v631 = vadd.f32 0.0, %v630
    %v632 = vpop.f32.mrb[0].mxu0
    %633 = vmatprep.mubr.bf16.mxu0 %v494
    %634 = vmatmul.mubr.bf16.gmra.mrb[0].mxu0 %v338
    %v635 = vpop.f32.mrb[0].mxu0
    %v636 = vadd.f32 0.0, %v635
    %v637 = vpop.f32.mrb[0].mxu0
    %v638 = vpop.f32.mrb[0].mxu0
    %v639 = vadd.f32 0.0, %v638
    %v640 = vpop.f32.mrb[0].mxu0
    %641 = vmatprep.mubr.bf16.mxu0 %v497
    %642 = vmatmul.mubr.bf16.gmra.mrb[0].mxu0 %v340
    %v643 = vpop.f32.mrb[0].mxu0
    %v644 = vadd.f32 0.0, %v643
    %v645 = vpop.f32.mrb[0].mxu0
    %v646 = vpop.f32.mrb[0].mxu0
    %v647 = vadd.f32 0.0, %v646
    %v648 = vpop.f32.mrb[0].mxu0
    %649 = vmatprep.mubr.bf16.mxu0 %v500
    %650 = vmatmul.mubr.bf16.gmra.mrb[0].mxu0 %v342
    %v651 = vpop.f32.mrb[0].mxu0
    %v652 = vadd.f32 0.0, %v651
    %v653 = vpop.f32.mrb[0].mxu0
    %v654 = vpop.f32.mrb[0].mxu0
    %v655 = vadd.f32 0.0, %v654
    %v656 = vpop.f32.mrb[0].mxu0
    %657 = vmatprep.mubr.bf16.mxu0 %v503
    %658 = vmatmul.mubr.bf16.gmra.mrb[0].mxu0 %v344
    %v659 = vpop.f32.mrb[0].mxu0
    %v660 = vadd.f32 0.0, %v659
    %v661 = vpop.f32.mrb[0].mxu0
    %v662 = vpop.f32.mrb[0].mxu0
    %v663 = vadd.f32 0.0, %v662
    %v664 = vpop.f32.mrb[0].mxu0
    %665 = vmatprep.mubr.bf16.mxu0 %v506
    %666 = vmatmul.mubr.bf16.gmra.mrb[0].mxu0 %v346
    %v667 = vpop.f32.mrb[0].mxu0
    %v668 = vadd.f32 0.0, %v667
    %v669 = vpop.f32.mrb[0].mxu0
    %v670 = vpop.f32.mrb[0].mxu0
    %v671 = vadd.f32 0.0, %v670
    %v672 = vpop.f32.mrb[0].mxu0
    %673 = vmatprep.mubr.bf16.mxu0 %v509
    %674 = vmatmul.mubr.bf16.gmra.mrb[0].mxu0 %v348
    %v675 = vpop.f32.mrb[0].mxu0
    %v676 = vadd.f32 0.0, %v675
    %v677 = vpop.f32.mrb[0].mxu0
    %v678 = vpop.f32.mrb[0].mxu0
    %v679 = vadd.f32 0.0, %v678
    %v680 = vpop.f32.mrb[0].mxu0
    %681 = vmatprep.mubr.bf16.mxu0 %v512
    %682 = vmatmul.mubr.bf16.gmra.mrb[0].mxu0 %v350
    %v683 = vpop.f32.mrb[0].mxu0
    %v684 = vadd.f32 0.0, %v683
    %v685 = vpop.f32.mrb[0].mxu0
    %v686 = vpop.f32.mrb[0].mxu0
    %v687 = vadd.f32 0.0, %v686
    %v688 = vpop.f32.mrb[0].mxu0
    %689 = vmatprep.mubr.bf16.mxu0 %v515
    %690 = vmatmul.mubr.bf16.gmra.mrb[0].mxu0 %v352
    %v691 = vpop.f32.mrb[0].mxu0
    %v692 = vadd.f32 0.0, %v691
    %v693 = vpop.f32.mrb[0].mxu0
    %v694 = vpop.f32.mrb[0].mxu0
    %v695 = vadd.f32 0.0, %v694
    %v696 = vpop.f32.mrb[0].mxu0
    %697 = vmatprep.mubr.bf16.mxu0 %v518
    %698 = vmatmul.mubr.bf16.gmra.mrb[0].mxu0 %v354
    %v699 = vpop.f32.mrb[0].mxu0
    %v700 = vadd.f32 0.0, %v699
    %v701 = vpop.f32.mrb[0].mxu0
    %v702 = vpop.f32.mrb[0].mxu0
    %v703 = vadd.f32 0.0, %v702
    %v704 = vpop.f32.mrb[0].mxu0
    %705 = vmatprep.mubr.bf16.mxu0 %v521
    %706 = vmatmul.mubr.bf16.gmra.mrb[0].mxu0 %v356
    %v707 = vpop.f32.mrb[0].mxu0
    %v708 = vadd.f32 0.0, %v707
    %v709 = vpop.f32.mrb[0].mxu0
    %v710 = vpop.f32.mrb[0].mxu0
    %v711 = vadd.f32 0.0, %v710
    %v712 = vpop.f32.mrb[0].mxu0
    %713 = vmatprep.mubr.bf16.mxu0 %v524
    %714 = vmatmul.mubr.bf16.gmra.mrb[0].mxu0 %v358
    %v715 = vpop.f32.mrb[0].mxu0
    %v716 = vadd.f32 0.0, %v715
    %v717 = vpop.f32.mrb[0].mxu0
    %v718 = vpop.f32.mrb[0].mxu0
    %v719 = vadd.f32 0.0, %v718
    %v720 = vpop.f32.mrb[0].mxu0
    %721 = vmatprep.mubr.bf16.mxu0 %v527
    %722 = vmatmul.mubr.bf16.gmra.mrb[0].mxu0 %v360
    %v723 = vpop.f32.mrb[0].mxu0
    %v724 = vadd.f32 0.0, %v723
    %v725 = vpop.f32.mrb[0].mxu0
    %v726 = vpop.f32.mrb[0].mxu0
    %v727 = vadd.f32 0.0, %v726
    %v728 = vpop.f32.mrb[0].mxu0
    %729 = vmatprep.mubr.bf16.mxu0 %v530
    %730 = vmatmul.mubr.bf16.gmra.mrb[0].mxu0 %v362
    %v731 = vpop.f32.mrb[0].mxu0
    %v732 = vadd.f32 0.0, %v731
    %v733 = vpop.f32.mrb[0].mxu0
    %v734 = vpop.f32.mrb[0].mxu0
    %v735 = vadd.f32 0.0, %v734
    %v736 = vpop.f32.mrb[0].mxu0
    %737 = vmatprep.mubr.bf16.mxu0 %v533
    %738 = vmatmul.mubr.bf16.gmra.mrb[0].mxu0 %v364
    %v739 = vpop.f32.mrb[0].mxu0
    %v740 = vadd.f32 0.0, %v739
    %v741 = vpop.f32.mrb[0].mxu0
    %v742 = vpop.f32.mrb[0].mxu0
    %v743 = vadd.f32 0.0, %v742
    %v744 = vpop.f32.mrb[0].mxu0
    %745 = vmatprep.mubr.bf16.mxu0 %v536
    %746 = vmatmul.mubr.bf16.gmra.mrb[0].mxu0 %v366
    %v747 = vpop.f32.mrb[0].mxu0
    %v748 = vadd.f32 0.0, %v747
    %v749 = vpop.f32.mrb[0].mxu0
    %v750 = vpop.f32.mrb[0].mxu0
    %v751 = vadd.f32 0.0, %v750
    %v752 = vpop.f32.mrb[0].mxu0
    %753 = vmatprep.mubr.bf16.mxu0 %v539
    %754 = vmatmul.mubr.bf16.gmra.mrb[0].mxu0 %v368
    %v755 = vpop.f32.mrb[0].mxu0
    %v756 = vadd.f32 0.0, %v755
    %v757 = vpop.f32.mrb[0].mxu0
    %v758 = vpop.f32.mrb[0].mxu0
    %v759 = vadd.f32 0.0, %v758
    %v760 = vpop.f32.mrb[0].mxu0
    %761 = vmatprep.mubr.bf16.mxu0 %v542
    %762 = vmatmul.mubr.bf16.gmra.mrb[0].mxu0 %v370
    %v763 = vpop.f32.mrb[0].mxu0
    %v764 = vadd.f32 0.0, %v763
    %v765 = vpop.f32.mrb[0].mxu0
    %v766 = vpop.f32.mrb[0].mxu0
    %v767 = vadd.f32 0.0, %v766
    %v768 = vpop.f32.mrb[0].mxu0
    %769 = vmatprep.mubr.bf16.mxu0 %v545
    %770 = vmatmul.mubr.bf16.gmra.mrb[0].mxu0 %v372
    %v771 = vpop.f32.mrb[0].mxu0
    %v772 = vadd.f32 0.0, %v771
    %v773 = vpop.f32.mrb[0].mxu0
    %v774 = vpop.f32.mrb[0].mxu0
    %v775 = vadd.f32 0.0, %v774
    %v776 = vpop.f32.mrb[0].mxu0
    %777 = vmatprep.mubr.bf16.mxu0 %v548
    %778 = vmatmul.mubr.bf16.gmra.mrb[0].mxu0 %v374
    %v779 = vpop.f32.mrb[0].mxu0
    %v780 = vadd.f32 0.0, %v779
    %v781 = vpop.f32.mrb[0].mxu0
    %v782 = vpop.f32.mrb[0].mxu0
    %v783 = vadd.f32 0.0, %v782
    %v784 = vpop.f32.mrb[0].mxu0
    %785 = vmatprep.mubr.bf16.mxu0 %v551
    %786 = vmatmul.mubr.bf16.gmra.mrb[0].mxu0 %v376
    %v787 = vpop.f32.mrb[0].mxu0
    %v788 = vadd.f32 0.0, %v787
    %v789 = vpop.f32.mrb[0].mxu0
    %v790 = vpop.f32.mrb[0].mxu0
    %v791 = vadd.f32 0.0, %v790
    %v792 = vpop.f32.mrb[0].mxu0
    %793 = vmatprep.mubr.bf16.mxu0 %v554
    %794 = vmatmul.mubr.bf16.gmra.mrb[0].mxu0 %v378
    %v795 = vpop.f32.mrb[0].mxu0
    %v796 = vadd.f32 0.0, %v795
    %v797 = vpop.f32.mrb[0].mxu0
    %v798 = vpop.f32.mrb[0].mxu0
    %v799 = vadd.f32 0.0, %v798
    %v800 = vpop.f32.mrb[0].mxu0
    %801 = vmatprep.mubr.bf16.mxu0 %v557
    %802 = vmatmul.mubr.bf16.gmra.mrb[0].mxu0 %v380
    %v803 = vpop.f32.mrb[0].mxu0
    %v804 = vadd.f32 0.0, %v803
    %v805 = vpop.f32.mrb[0].mxu0
    %v806 = vpop.f32.mrb[0].mxu0
    %v807 = vadd.f32 0.0, %v806
    %v808 = vpop.f32.mrb[0].mxu0
    %809 = vmatprep.mubr.bf16.mxu0 %v560
    %810 = vmatmul.mubr.bf16.gmra.mrb[0].mxu0 %v382
    %v811 = vpop.f32.mrb[0].mxu0
    %v812 = vadd.f32 0.0, %v811
    %v813 = vpop.f32.mrb[0].mxu0
    %v814 = vpop.f32.mrb[0].mxu0
    %v815 = vadd.f32 0.0, %v814
    %v816 = vpop.f32.mrb[0].mxu0
    %817 = vmatprep.mubr.bf16.mxu0 %v563
    %818 = vmatmul.mubr.bf16.gmra.mrb[0].mxu0 %v384
    %v819 = vpop.f32.mrb[0].mxu0
    %v820 = vadd.f32 0.0, %v819
    %v821 = vpop.f32.mrb[0].mxu0
    %v822 = vpop.f32.mrb[0].mxu0
    %v823 = vadd.f32 0.0, %v822
    %v824 = vpop.f32.mrb[0].mxu0
    %825 = vmatprep.mubr.bf16.mxu0 %v566
    %826 = vmatmul.mubr.bf16.gmra.mrb[0].mxu0 %v386
    %v827 = vpop.f32.mrb[0].mxu0
    %v828 = vadd.f32 0.0, %v827
    %v829 = vpop.f32.mrb[0].mxu0
    %v830 = vpop.f32.mrb[0].mxu0
    %v831 = vadd.f32 0.0, %v830
    %v832 = vpop.f32.mrb[0].mxu0
    %833 = vmatprep.mubr.bf16.mxu0 %v569
    %834 = vmatmul.mubr.bf16.gmra.mrb[0].mxu0 %v388
    %v835 = vpop.f32.mrb[0].mxu0
    %v836 = vadd.f32 0.0, %v835
    %v837 = vpop.f32.mrb[0].mxu0
    %v838 = vpop.f32.mrb[0].mxu0
    %v839 = vadd.f32 0.0, %v838
    %v840 = vpop.f32.mrb[0].mxu0
    %841 = vmatprep.mubr.bf16.mxu0 %v572
    %842 = vmatmul.mubr.bf16.gmra.mrb[0].mxu0 %v390
    %v843 = vpop.f32.mrb[0].mxu0
    %v844 = vadd.f32 0.0, %v843
    %v845 = vpop.f32.mrb[0].mxu0
    %v846 = vpop.f32.mrb[0].mxu0
    %v847 = vadd.f32 0.0, %v846
    %v848 = vpop.f32.mrb[0].mxu0
    %849 = vmatprep.mubr.bf16.mxu0 %v575
    %850 = vmatmul.mubr.bf16.gmra.mrb[0].mxu0 %v392
    %v851 = vpop.f32.mrb[0].mxu0
    %v852 = vadd.f32 0.0, %v851
    %v853 = vpop.f32.mrb[0].mxu0
    %v854 = vpop.f32.mrb[0].mxu0
    %v855 = vadd.f32 0.0, %v854
    %v856 = vpop.f32.mrb[0].mxu0
    %857 = vmatprep.mubr.bf16.mxu0 %v578
    %858 = vmatmul.mubr.bf16.gmra.mrb[0].mxu0 %v394
    %v859 = vpop.f32.mrb[0].mxu0
    %v860 = vadd.f32 0.0, %v859
    %v861 = vpop.f32.mrb[0].mxu0
    %v862 = vpop.f32.mrb[0].mxu0
    %v863 = vadd.f32 0.0, %v862
    %v864 = vpop.f32.mrb[0].mxu0
    %865 = vmatprep.mubr.bf16.mxu0 %v581
    %866 = vmatmul.mubr.bf16.gmra.mrb[0].mxu0 %v396
    %v867 = vpop.f32.mrb[0].mxu0
    %v868 = vadd.f32 0.0, %v867
    %v869 = vpop.f32.mrb[0].mxu0
    %v870 = vpop.f32.mrb[0].mxu0
    %v871 = vadd.f32 0.0, %v870
    %v872 = vpop.f32.mrb[0].mxu0
    %873 = vmatprep.mubr.bf16.mxu0 %v584
    %874 = vmatmul.mubr.bf16.gmra.mrb[0].mxu0 %v398
    %v875 = vpop.f32.mrb[0].mxu0
    %v876 = vadd.f32 0.0, %v875
    %v877 = vpop.f32.mrb[0].mxu0
    %v878 = vpop.f32.mrb[0].mxu0
    %v879 = vadd.f32 0.0, %v878
    %v880 = vpop.f32.mrb[0].mxu0
    %881 = vdwg.mxu0
    %v882 = vpack.c.bf16 %v631, %v628
    %v883 = vpack.c.bf16 %v639, %v636
    %v884 = vpack.c.bf16 %v647, %v644
    %v885 = vpack.c.bf16 %v655, %v652
    %v886 = vpack.c.bf16 %v663, %v660
    %v887 = vpack.c.bf16 %v671, %v668
    %v888 = vpack.c.bf16 %v679, %v676
    %v889 = vpack.c.bf16 %v687, %v684
    %v890 = vpack.c.bf16 %v695, %v692
    %v891 = vpack.c.bf16 %v703, %v700
    %v892 = vpack.c.bf16 %v711, %v708
    %v893 = vpack.c.bf16 %v719, %v716
    %v894 = vpack.c.bf16 %v727, %v724
    %v895 = vpack.c.bf16 %v735, %v732
    %v896 = vpack.c.bf16 %v743, %v740
    %v897 = vpack.c.bf16 %v751, %v748
    %v898 = vpack.c.bf16 %v759, %v756
    %v899 = vpack.c.bf16 %v767, %v764
    %v900 = vpack.c.bf16 %v775, %v772
    %v901 = vpack.c.bf16 %v783, %v780
    %v902 = vpack.c.bf16 %v791, %v788
    %v903 = vpack.c.bf16 %v799, %v796
    %v904 = vpack.c.bf16 %v807, %v804
    %v905 = vpack.c.bf16 %v815, %v812
    %v906 = vpack.c.bf16 %v823, %v820
    %v907 = vpack.c.bf16 %v831, %v828
    %v908 = vpack.c.bf16 %v839, %v836
    %v909 = vpack.c.bf16 %v847, %v844
    %v910 = vpack.c.bf16 %v855, %v852
    %v911 = vpack.c.bf16 %v863, %v860
    %v912 = vpack.c.bf16 %v871, %v868
    %v913 = vpack.c.bf16 %v879, %v876
    %v946 = vunpack.c.l.b16 %v882
    %v947 = vunpack.c.h.b16 %v882
    %v948 = vunpack.c.l.b16 %v883
    %v949 = vunpack.c.h.b16 %v883
    %v950 = vunpack.c.l.b16 %v884
    %v951 = vunpack.c.h.b16 %v884
    %v952 = vunpack.c.l.b16 %v885
    %v953 = vunpack.c.h.b16 %v885
    %v954 = vunpack.c.l.b16 %v886
    %v955 = vunpack.c.h.b16 %v886
    %v956 = vunpack.c.l.b16 %v887
    %v957 = vunpack.c.h.b16 %v887
    %v958 = vunpack.c.l.b16 %v888
    %v959 = vunpack.c.h.b16 %v888
    %v960 = vunpack.c.l.b16 %v889
    %v961 = vunpack.c.h.b16 %v889
    %v962 = vunpack.c.l.b16 %v890
    %v963 = vunpack.c.h.b16 %v890
    %v964 = vunpack.c.l.b16 %v891
    %v965 = vunpack.c.h.b16 %v891
    %v966 = vunpack.c.l.b16 %v892
    %v967 = vunpack.c.h.b16 %v892
    %v968 = vunpack.c.l.b16 %v893
    %v969 = vunpack.c.h.b16 %v893
    %v970 = vunpack.c.l.b16 %v894
    %v971 = vunpack.c.h.b16 %v894
    %v972 = vunpack.c.l.b16 %v895
    %v973 = vunpack.c.h.b16 %v895
    %v974 = vunpack.c.l.b16 %v896
    %v975 = vunpack.c.h.b16 %v896
    %v976 = vunpack.c.l.b16 %v897
    %v977 = vunpack.c.h.b16 %v897
    %v978 = vunpack.c.l.b16 %v898
    %v979 = vunpack.c.h.b16 %v898
    %v980 = vunpack.c.l.b16 %v899
    %v981 = vunpack.c.h.b16 %v899
    %v982 = vunpack.c.l.b16 %v900
    %v983 = vunpack.c.h.b16 %v900
    %v984 = vunpack.c.l.b16 %v901
    %v985 = vunpack.c.h.b16 %v901
    %v986 = vunpack.c.l.b16 %v902
    %v987 = vunpack.c.h.b16 %v902
    %v988 = vunpack.c.l.b16 %v903
    %v989 = vunpack.c.h.b16 %v903
    %v990 = vunpack.c.l.b16 %v904
    %v991 = vunpack.c.h.b16 %v904
    %v992 = vunpack.c.l.b16 %v905
    %v993 = vunpack.c.h.b16 %v905
    %v994 = vunpack.c.l.b16 %v906
    %v995 = vunpack.c.h.b16 %v906
    %v996 = vunpack.c.l.b16 %v907
    %v997 = vunpack.c.h.b16 %v907
    %v998 = vunpack.c.l.b16 %v908
    %v999 = vunpack.c.h.b16 %v908
    %v1000 = vunpack.c.l.b16 %v909
    %v1001 = vunpack.c.h.b16 %v909
    %v1002 = vunpack.c.l.b16 %v910
    %v1003 = vunpack.c.h.b16 %v910
    %v1004 = vunpack.c.l.b16 %v911
    %v1005 = vunpack.c.h.b16 %v911
    %v1006 = vunpack.c.l.b16 %v912
    %v1007 = vunpack.c.h.b16 %v912
    %v1008 = vunpack.c.l.b16 %v913
    %v1009 = vunpack.c.h.b16 %v913
    %v1010 = vpack.c.b16 %v946, %v946
    %v1011 = vpack.c.b16 %v947, %v947
    %v1012 = vpack.c.b16 %v948, %v948
    %v1013 = vpack.c.b16 %v949, %v949
    %v1014 = vpack.c.b16 %v950, %v950
    %v1015 = vpack.c.b16 %v951, %v951
    %v1016 = vpack.c.b16 %v952, %v952
    %v1017 = vpack.c.b16 %v953, %v953
    %v1018 = vpack.c.b16 %v954, %v954
    %v1019 = vpack.c.b16 %v955, %v955
    %v1020 = vpack.c.b16 %v956, %v956
    %v1021 = vpack.c.b16 %v957, %v957
    %v1022 = vpack.c.b16 %v958, %v958
    %v1023 = vpack.c.b16 %v959, %v959
    %v1024 = vpack.c.b16 %v960, %v960
    %v1025 = vpack.c.b16 %v961, %v961
    %v1026 = vpack.c.b16 %v962, %v962
    %v1027 = vpack.c.b16 %v963, %v963
    %v1028 = vpack.c.b16 %v964, %v964
    %v1029 = vpack.c.b16 %v965, %v965
    %v1030 = vpack.c.b16 %v966, %v966
    %v1031 = vpack.c.b16 %v967, %v967
    %v1032 = vpack.c.b16 %v968, %v968
    %v1033 = vpack.c.b16 %v969, %v969
    %v1034 = vpack.c.b16 %v970, %v970
    %v1035 = vpack.c.b16 %v971, %v971
    %v1036 = vpack.c.b16 %v972, %v972
    %v1037 = vpack.c.b16 %v973, %v973
    %v1038 = vpack.c.b16 %v974, %v974
    %v1039 = vpack.c.b16 %v975, %v975
    %v1040 = vpack.c.b16 %v976, %v976
    %v1041 = vpack.c.b16 %v977, %v977
    %v1042 = vpack.c.b16 %v978, %v978
    %v1043 = vpack.c.b16 %v979, %v979
    %v1044 = vpack.c.b16 %v980, %v980
    %v1045 = vpack.c.b16 %v981, %v981
    %v1046 = vpack.c.b16 %v982, %v982
    %v1047 = vpack.c.b16 %v983, %v983
    %v1048 = vpack.c.b16 %v984, %v984
    %v1049 = vpack.c.b16 %v985, %v985
    %v1050 = vpack.c.b16 %v986, %v986
    %v1051 = vpack.c.b16 %v987, %v987
    %v1052 = vpack.c.b16 %v988, %v988
    %v1053 = vpack.c.b16 %v989, %v989
    %v1054 = vpack.c.b16 %v990, %v990
    %v1055 = vpack.c.b16 %v991, %v991
    %v1056 = vpack.c.b16 %v992, %v992
    %v1057 = vpack.c.b16 %v993, %v993
    %v1058 = vpack.c.b16 %v994, %v994
    %v1059 = vpack.c.b16 %v995, %v995
    %v1060 = vpack.c.b16 %v996, %v996
    %v1061 = vpack.c.b16 %v997, %v997
    %v1062 = vpack.c.b16 %v998, %v998
    %v1063 = vpack.c.b16 %v999, %v999
    %v1064 = vpack.c.b16 %v1000, %v1000
    %v1065 = vpack.c.b16 %v1001, %v1001
    %v1066 = vpack.c.b16 %v1002, %v1002
    %v1067 = vpack.c.b16 %v1003, %v1003
    %v1068 = vpack.c.b16 %v1004, %v1004
    %v1069 = vpack.c.b16 %v1005, %v1005
    %v1070 = vpack.c.b16 %v1006, %v1006
    %v1071 = vpack.c.b16 %v1007, %v1007
    %v1072 = vpack.c.b16 %v1008, %v1008
    %v1073 = vpack.c.b16 %v1009, %v1009
    %vm1138 = vcmask 519168
    %1139 = vst.msk [vmem:[#allocation7] sm:$0xf] %vm1138, %v1010
    %1140 = vst.msk [vmem:[#allocation7 + $0x4] sm:$0xf] %vm1138, %v1011
    %1141 = vst.msk [vmem:[#allocation7 + $0x8] sm:$0xf] %vm1138, %v1012
    %1142 = vst.msk [vmem:[#allocation7 + $0xc] sm:$0xf] %vm1138, %v1013
    %1143 = vst.msk [vmem:[#allocation7 + $0x10] sm:$0xf] %vm1138, %v1014
    %1144 = vst.msk [vmem:[#allocation7 + $0x14] sm:$0xf] %vm1138, %v1015
    %1145 = vst.msk [vmem:[#allocation7 + $0x18] sm:$0xf] %vm1138, %v1016
    %1146 = vst.msk [vmem:[#allocation7 + $0x1c] sm:$0xf] %vm1138, %v1017
    %1147 = vst.msk [vmem:[#allocation7 + $0x20] sm:$0xf] %vm1138, %v1018
    %1148 = vst.msk [vmem:[#allocation7 + $0x24] sm:$0xf] %vm1138, %v1019
    %1149 = vst.msk [vmem:[#allocation7 + $0x28] sm:$0xf] %vm1138, %v1020
    %1150 = vst.msk [vmem:[#allocation7 + $0x2c] sm:$0xf] %vm1138, %v1021
    %1151 = vst.msk [vmem:[#allocation7 + $0x30] sm:$0xf] %vm1138, %v1022
    %1152 = vst.msk [vmem:[#allocation7 + $0x34] sm:$0xf] %vm1138, %v1023
    %1153 = vst.msk [vmem:[#allocation7 + $0x38] sm:$0xf] %vm1138, %v1024
    %1154 = vst.msk [vmem:[#allocation7 + $0x3c] sm:$0xf] %vm1138, %v1025
    %1155 = vst.msk [vmem:[#allocation7 + $0x40] sm:$0xf] %vm1138, %v1026
    %1156 = vst.msk [vmem:[#allocation7 + $0x44] sm:$0xf] %vm1138, %v1027
    %1157 = vst.msk [vmem:[#allocation7 + $0x48] sm:$0xf] %vm1138, %v1028
    %1158 = vst.msk [vmem:[#allocation7 + $0x4c] sm:$0xf] %vm1138, %v1029
    %1159 = vst.msk [vmem:[#allocation7 + $0x50] sm:$0xf] %vm1138, %v1030
    %1160 = vst.msk [vmem:[#allocation7 + $0x54] sm:$0xf] %vm1138, %v1031
    %1161 = vst.msk [vmem:[#allocation7 + $0x58] sm:$0xf] %vm1138, %v1032
    %1162 = vst.msk [vmem:[#allocation7 + $0x5c] sm:$0xf] %vm1138, %v1033
    %1163 = vst.msk [vmem:[#allocation7 + $0x60] sm:$0xf] %vm1138, %v1034
    %1164 = vst.msk [vmem:[#allocation7 + $0x64] sm:$0xf] %vm1138, %v1035
    %1165 = vst.msk [vmem:[#allocation7 + $0x68] sm:$0xf] %vm1138, %v1036
    %1166 = vst.msk [vmem:[#allocation7 + $0x6c] sm:$0xf] %vm1138, %v1037
    %1167 = vst.msk [vmem:[#allocation7 + $0x70] sm:$0xf] %vm1138, %v1038
    %1168 = vst.msk [vmem:[#allocation7 + $0x74] sm:$0xf] %vm1138, %v1039
    %1169 = vst.msk [vmem:[#allocation7 + $0x78] sm:$0xf] %vm1138, %v1040
    %1170 = vst.msk [vmem:[#allocation7 + $0x7c] sm:$0xf] %vm1138, %v1041
    %1171 = vst.msk [vmem:[#allocation7 + $0x80] sm:$0xf] %vm1138, %v1042
    %1172 = vst.msk [vmem:[#allocation7 + $0x84] sm:$0xf] %vm1138, %v1043
    %1173 = vst.msk [vmem:[#allocation7 + $0x88] sm:$0xf] %vm1138, %v1044
    %1174 = vst.msk [vmem:[#allocation7 + $0x8c] sm:$0xf] %vm1138, %v1045
    %1175 = vst.msk [vmem:[#allocation7 + $0x90] sm:$0xf] %vm1138, %v1046
    %1176 = vst.msk [vmem:[#allocation7 + $0x94] sm:$0xf] %vm1138, %v1047
    %1177 = vst.msk [vmem:[#allocation7 + $0x98] sm:$0xf] %vm1138, %v1048
    %1178 = vst.msk [vmem:[#allocation7 + $0x9c] sm:$0xf] %vm1138, %v1049
    %1179 = vst.msk [vmem:[#allocation7 + $0xa0] sm:$0xf] %vm1138, %v1050
    %1180 = vst.msk [vmem:[#allocation7 + $0xa4] sm:$0xf] %vm1138, %v1051
    %1181 = vst.msk [vmem:[#allocation7 + $0xa8] sm:$0xf] %vm1138, %v1052
    %1182 = vst.msk [vmem:[#allocation7 + $0xac] sm:$0xf] %vm1138, %v1053
    %1183 = vst.msk [vmem:[#allocation7 + $0xb0] sm:$0xf] %vm1138, %v1054
    %1184 = vst.msk [vmem:[#allocation7 + $0xb4] sm:$0xf] %vm1138, %v1055
    %1185 = vst.msk [vmem:[#allocation7 + $0xb8] sm:$0xf] %vm1138, %v1056
    %1186 = vst.msk [vmem:[#allocation7 + $0xbc] sm:$0xf] %vm1138, %v1057
    %1187 = vst.msk [vmem:[#allocation7 + $0xc0] sm:$0xf] %vm1138, %v1058
    %1188 = vst.msk [vmem:[#allocation7 + $0xc4] sm:$0xf] %vm1138, %v1059
    %1189 = vst.msk [vmem:[#allocation7 + $0xc8] sm:$0xf] %vm1138, %v1060
    %1190 = vst.msk [vmem:[#allocation7 + $0xcc] sm:$0xf] %vm1138, %v1061
    %1191 = vst.msk [vmem:[#allocation7 + $0xd0] sm:$0xf] %vm1138, %v1062
    %1192 = vst.msk [vmem:[#allocation7 + $0xd4] sm:$0xf] %vm1138, %v1063
    %1193 = vst.msk [vmem:[#allocation7 + $0xd8] sm:$0xf] %vm1138, %v1064
    %1194 = vst.msk [vmem:[#allocation7 + $0xdc] sm:$0xf] %vm1138, %v1065
    %1195 = vst.msk [vmem:[#allocation7 + $0xe0] sm:$0xf] %vm1138, %v1066
    %1196 = vst.msk [vmem:[#allocation7 + $0xe4] sm:$0xf] %vm1138, %v1067
    %1197 = vst.msk [vmem:[#allocation7 + $0xe8] sm:$0xf] %vm1138, %v1068
    %1198 = vst.msk [vmem:[#allocation7 + $0xec] sm:$0xf] %vm1138, %v1069
    %1199 = vst.msk [vmem:[#allocation7 + $0xf0] sm:$0xf] %vm1138, %v1070
    %1200 = vst.msk [vmem:[#allocation7 + $0xf4] sm:$0xf] %vm1138, %v1071
    %1201 = vst.msk [vmem:[#allocation7 + $0xf8] sm:$0xf] %vm1138, %v1072
    %1202 = vst.msk [vmem:[#allocation7 + $0xfc] sm:$0xf] %vm1138, %v1073
    %vm1203 = vcmask 523264
    %v1204 = vsel %vm1203, %v628, 0.0
    %v1205 = vsel %vm1203, %v631, 0.0
    %v1206 = vadd.f32 %v1204, %v1205
    %v1207 = vsel %vm1203, %v636, 0.0
    %v1208 = vadd.f32 %v1206, %v1207
    %v1209 = vsel %vm1203, %v639, 0.0
    %v1210 = vadd.f32 %v1208, %v1209
    %v1211 = vsel %vm1203, %v644, 0.0
    %v1212 = vadd.f32 %v1210, %v1211
    %v1213 = vsel %vm1203, %v647, 0.0
    %v1214 = vadd.f32 %v1212, %v1213
    %v1215 = vsel %vm1203, %v652, 0.0
    %v1216 = vadd.f32 %v1214, %v1215
    %v1217 = vsel %vm1203, %v655, 0.0
    %v1218 = vadd.f32 %v1216, %v1217
    %v1219 = vsel %vm1203, %v660, 0.0
    %v1220 = vadd.f32 %v1218, %v1219
    %v1221 = vsel %vm1203, %v663, 0.0
    %v1222 = vadd.f32 %v1220, %v1221
    %v1223 = vsel %vm1203, %v668, 0.0
    %v1224 = vadd.f32 %v1222, %v1223
    %v1225 = vsel %vm1203, %v671, 0.0
    %v1226 = vadd.f32 %v1224, %v1225
    %v1227 = vsel %vm1203, %v676, 0.0
    %v1228 = vadd.f32 %v1226, %v1227
    %v1229 = vsel %vm1203, %v679, 0.0
    %v1230 = vadd.f32 %v1228, %v1229
    %v1231 = vsel %vm1203, %v684, 0.0
    %v1232 = vadd.f32 %v1230, %v1231
    %v1233 = vsel %vm1203, %v687, 0.0
    %v1234 = vadd.f32 %v1232, %v1233
    %v1235 = vsel %vm1203, %v692, 0.0
    %v1236 = vadd.f32 %v1234, %v1235
    %v1237 = vsel %vm1203, %v695, 0.0
    %v1238 = vadd.f32 %v1236, %v1237
    %v1239 = vsel %vm1203, %v700, 0.0
    %v1240 = vadd.f32 %v1238, %v1239
    %v1241 = vsel %vm1203, %v703, 0.0
    %v1242 = vadd.f32 %v1240, %v1241
    %v1243 = vsel %vm1203, %v708, 0.0
    %v1244 = vadd.f32 %v1242, %v1243
    %v1245 = vsel %vm1203, %v711, 0.0
    %v1246 = vadd.f32 %v1244, %v1245
    %v1247 = vsel %vm1203, %v716, 0.0
    %v1248 = vadd.f32 %v1246, %v1247
    %v1249 = vsel %vm1203, %v719, 0.0
    %v1250 = vadd.f32 %v1248, %v1249
    %v1251 = vsel %vm1203, %v724, 0.0
    %v1252 = vadd.f32 %v1250, %v1251
    %v1253 = vsel %vm1203, %v727, 0.0
    %v1254 = vadd.f32 %v1252, %v1253
    %v1255 = vsel %vm1203, %v732, 0.0
    %v1256 = vadd.f32 %v1254, %v1255
    %v1257 = vsel %vm1203, %v735, 0.0
    %v1258 = vadd.f32 %v1256, %v1257
    %v1259 = vsel %vm1203, %v740, 0.0
    %v1260 = vadd.f32 %v1258, %v1259
    %v1261 = vsel %vm1203, %v743, 0.0
    %v1262 = vadd.f32 %v1260, %v1261
    %v1263 = vsel %vm1203, %v748, 0.0
    %v1264 = vadd.f32 %v1262, %v1263
    %v1265 = vsel %vm1203, %v751, 0.0
    %v1266 = vadd.f32 %v1264, %v1265
    %v1267 = vsel %vm1203, %v756, 0.0
    %v1268 = vadd.f32 %v1266, %v1267
    %v1269 = vsel %vm1203, %v759, 0.0
    %v1270 = vadd.f32 %v1268, %v1269
    %v1271 = vsel %vm1203, %v764, 0.0
    %v1272 = vadd.f32 %v1270, %v1271
    %v1273 = vsel %vm1203, %v767, 0.0
    %v1274 = vadd.f32 %v1272, %v1273
    %v1275 = vsel %vm1203, %v772, 0.0
    %v1276 = vadd.f32 %v1274, %v1275
    %v1277 = vsel %vm1203, %v775, 0.0
    %v1278 = vadd.f32 %v1276, %v1277
    %v1279 = vsel %vm1203, %v780, 0.0
    %v1280 = vadd.f32 %v1278, %v1279
    %v1281 = vsel %vm1203, %v783, 0.0
    %v1282 = vadd.f32 %v1280, %v1281
    %v1283 = vsel %vm1203, %v788, 0.0
    %v1284 = vadd.f32 %v1282, %v1283
    %v1285 = vsel %vm1203, %v791, 0.0
    %v1286 = vadd.f32 %v1284, %v1285
    %v1287 = vsel %vm1203, %v796, 0.0
    %v1288 = vadd.f32 %v1286, %v1287
    %v1289 = vsel %vm1203, %v799, 0.0
    %v1290 = vadd.f32 %v1288, %v1289
    %v1291 = vsel %vm1203, %v804, 0.0
    %v1292 = vadd.f32 %v1290, %v1291
    %v1293 = vsel %vm1203, %v807, 0.0
    %v1294 = vadd.f32 %v1292, %v1293
    %v1295 = vsel %vm1203, %v812, 0.0
    %v1296 = vadd.f32 %v1294, %v1295
    %v1297 = vsel %vm1203, %v815, 0.0
    %v1298 = vadd.f32 %v1296, %v1297
    %v1299 = vsel %vm1203, %v820, 0.0
    %v1300 = vadd.f32 %v1298, %v1299
    %v1301 = vsel %vm1203, %v823, 0.0
    %v1302 = vadd.f32 %v1300, %v1301
    %v1303 = vsel %vm1203, %v828, 0.0
    %v1304 = vadd.f32 %v1302, %v1303
    %v1305 = vsel %vm1203, %v831, 0.0
    %v1306 = vadd.f32 %v1304, %v1305
    %v1307 = vsel %vm1203, %v836, 0.0
    %v1308 = vadd.f32 %v1306, %v1307
    %v1309 = vsel %vm1203, %v839, 0.0
    %v1310 = vadd.f32 %v1308, %v1309
    %v1311 = vsel %vm1203, %v844, 0.0
    %v1312 = vadd.f32 %v1310, %v1311
    %v1313 = vsel %vm1203, %v847, 0.0
    %v1314 = vadd.f32 %v1312, %v1313
    %v1315 = vsel %vm1203, %v852, 0.0
    %v1316 = vadd.f32 %v1314, %v1315
    %v1317 = vsel %vm1203, %v855, 0.0
    %v1318 = vadd.f32 %v1316, %v1317
    %v1319 = vsel %vm1203, %v860, 0.0
    %v1320 = vadd.f32 %v1318, %v1319
    %v1321 = vsel %vm1203, %v863, 0.0
    %v1322 = vadd.f32 %v1320, %v1321
    %v1323 = vsel %vm1203, %v868, 0.0
    %v1324 = vadd.f32 %v1322, %v1323
    %v1325 = vsel %vm1203, %v871, 0.0
    %v1326 = vadd.f32 %v1324, %v1325
    %v1327 = vsel %vm1203, %v876, 0.0
    %v1328 = vadd.f32 %v1326, %v1327
    %v1329 = vsel %vm1203, %v879, 0.0
    %v1330 = vadd.f32 %v1328, %v1329
    %v1331 = vrot.slane %v1330, 4
    %v1332 = vadd.f32 %v1330, %v1331
    %v1333 = vrot.slane %v1332, 2
    %v1334 = vadd.f32 %v1332, %v1333
    %v1335 = vrot.slane %v1334, 1
    %v1336 = vadd.f32 %v1334, %v1335
    %v1337 = vmul.f32 %v628, %v628
    %v1338 = vmul.f32 %v631, %v631
    %v1339 = vmul.f32 %v636, %v636
    %v1340 = vmul.f32 %v639, %v639
    %v1341 = vmul.f32 %v644, %v644
    %v1342 = vmul.f32 %v647, %v647
    %v1343 = vmul.f32 %v652, %v652
    %v1344 = vmul.f32 %v655, %v655
    %v1345 = vmul.f32 %v660, %v660
    %v1346 = vmul.f32 %v663, %v663
    %v1347 = vmul.f32 %v668, %v668
    %v1348 = vmul.f32 %v671, %v671
    %v1349 = vmul.f32 %v676, %v676
    %v1350 = vmul.f32 %v679, %v679
    %v1351 = vmul.f32 %v684, %v684
    %v1352 = vmul.f32 %v687, %v687
    %v1353 = vmul.f32 %v692, %v692
    %v1354 = vmul.f32 %v695, %v695
    %v1355 = vmul.f32 %v700, %v700
    %v1356 = vmul.f32 %v703, %v703
    %v1357 = vmul.f32 %v708, %v708
    %v1358 = vmul.f32 %v711, %v711
    %v1359 = vmul.f32 %v716, %v716
    %v1360 = vmul.f32 %v719, %v719
    %v1361 = vmul.f32 %v724, %v724
    %v1362 = vmul.f32 %v727, %v727
    %v1363 = vmul.f32 %v732, %v732
    %v1364 = vmul.f32 %v735, %v735
    %v1365 = vmul.f32 %v740, %v740
    %v1366 = vmul.f32 %v743, %v743
    %v1367 = vmul.f32 %v748, %v748
    %v1368 = vmul.f32 %v751, %v751
    %v1369 = vmul.f32 %v756, %v756
    %v1370 = vmul.f32 %v759, %v759
    %v1371 = vmul.f32 %v764, %v764
    %v1372 = vmul.f32 %v767, %v767
    %v1373 = vmul.f32 %v772, %v772
    %v1374 = vmul.f32 %v775, %v775
    %v1375 = vmul.f32 %v780, %v780
    %v1376 = vmul.f32 %v783, %v783
    %v1377 = vmul.f32 %v788, %v788
    %v1378 = vmul.f32 %v791, %v791
    %v1379 = vmul.f32 %v796, %v796
    %v1380 = vmul.f32 %v799, %v799
    %v1381 = vmul.f32 %v804, %v804
    %v1382 = vmul.f32 %v807, %v807
    %v1383 = vmul.f32 %v812, %v812
    %v1384 = vmul.f32 %v815, %v815
    %v1385 = vmul.f32 %v820, %v820
    %v1386 = vmul.f32 %v823, %v823
    %v1387 = vmul.f32 %v828, %v828
    %v1388 = vmul.f32 %v831, %v831
    %v1389 = vmul.f32 %v836, %v836
    %v1390 = vmul.f32 %v839, %v839
    %v1391 = vmul.f32 %v844, %v844
    %v1392 = vmul.f32 %v847, %v847
    %v1393 = vmul.f32 %v852, %v852
    %v1394 = vmul.f32 %v855, %v855
    %v1395 = vmul.f32 %v860, %v860
    %v1396 = vmul.f32 %v863, %v863
    %v1397 = vmul.f32 %v868, %v868
    %v1398 = vmul.f32 %v871, %v871
    %v1399 = vmul.f32 %v876, %v876
    %v1400 = vmul.f32 %v879, %v879
    %v1401 = vsel %vm1203, %v1337, 0.0
    %v1402 = vsel %vm1203, %v1338, 0.0
    %v1403 = vadd.f32 %v1401, %v1402
    %v1404 = vsel %vm1203, %v1339, 0.0
    %v1405 = vadd.f32 %v1403, %v1404
    %v1406 = vsel %vm1203, %v1340, 0.0
    %v1407 = vadd.f32 %v1405, %v1406
    %v1408 = vsel %vm1203, %v1341, 0.0
    %v1409 = vadd.f32 %v1407, %v1408
    %v1410 = vsel %vm1203, %v1342, 0.0
    %v1411 = vadd.f32 %v1409, %v1410
    %v1412 = vsel %vm1203, %v1343, 0.0
    %v1413 = vadd.f32 %v1411, %v1412
    %v1414 = vsel %vm1203, %v1344, 0.0
    %v1415 = vadd.f32 %v1413, %v1414
    %v1416 = vsel %vm1203, %v1345, 0.0
    %v1417 = vadd.f32 %v1415, %v1416
    %v1418 = vsel %vm1203, %v1346, 0.0
    %v1419 = vadd.f32 %v1417, %v1418
    %v1420 = vsel %vm1203, %v1347, 0.0
    %v1421 = vadd.f32 %v1419, %v1420
    %v1422 = vsel %vm1203, %v1348, 0.0
    %v1423 = vadd.f32 %v1421, %v1422
    %v1424 = vsel %vm1203, %v1349, 0.0
    %v1425 = vadd.f32 %v1423, %v1424
    %v1426 = vsel %vm1203, %v1350, 0.0
    %v1427 = vadd.f32 %v1425, %v1426
    %v1428 = vsel %vm1203, %v1351, 0.0
    %v1429 = vadd.f32 %v1427, %v1428
    %v1430 = vsel %vm1203, %v1352, 0.0
    %v1431 = vadd.f32 %v1429, %v1430
    %v1432 = vsel %vm1203, %v1353, 0.0
    %v1433 = vadd.f32 %v1431, %v1432
    %v1434 = vsel %vm1203, %v1354, 0.0
    %v1435 = vadd.f32 %v1433, %v1434
    %v1436 = vsel %vm1203, %v1355, 0.0
    %v1437 = vadd.f32 %v1435, %v1436
    %v1438 = vsel %vm1203, %v1356, 0.0
    %v1439 = vadd.f32 %v1437, %v1438
    %v1440 = vsel %vm1203, %v1357, 0.0
    %v1441 = vadd.f32 %v1439, %v1440
    %v1442 = vsel %vm1203, %v1358, 0.0
    %v1443 = vadd.f32 %v1441, %v1442
    %v1444 = vsel %vm1203, %v1359, 0.0
    %v1445 = vadd.f32 %v1443, %v1444
    %v1446 = vsel %vm1203, %v1360, 0.0
    %v1447 = vadd.f32 %v1445, %v1446
    %v1448 = vsel %vm1203, %v1361, 0.0
    %v1449 = vadd.f32 %v1447, %v1448
    %v1450 = vsel %vm1203, %v1362, 0.0
    %v1451 = vadd.f32 %v1449, %v1450
    %v1452 = vsel %vm1203, %v1363, 0.0
    %v1453 = vadd.f32 %v1451, %v1452
    %v1454 = vsel %vm1203, %v1364, 0.0
    %v1455 = vadd.f32 %v1453, %v1454
    %v1456 = vsel %vm1203, %v1365, 0.0
    %v1457 = vadd.f32 %v1455, %v1456
    %v1458 = vsel %vm1203, %v1366, 0.0
    %v1459 = vadd.f32 %v1457, %v1458
    %v1460 = vsel %vm1203, %v1367, 0.0
    %v1461 = vadd.f32 %v1459, %v1460
    %v1462 = vsel %vm1203, %v1368, 0.0
    %v1463 = vadd.f32 %v1461, %v1462
    %v1464 = vsel %vm1203, %v1369, 0.0
    %v1465 = vadd.f32 %v1463, %v1464
    %v1466 = vsel %vm1203, %v1370, 0.0
    %v1467 = vadd.f32 %v1465, %v1466
    %v1468 = vsel %vm1203, %v1371, 0.0
    %v1469 = vadd.f32 %v1467, %v1468
    %v1470 = vsel %vm1203, %v1372, 0.0
    %v1471 = vadd.f32 %v1469, %v1470
    %v1472 = vsel %vm1203, %v1373, 0.0
    %v1473 = vadd.f32 %v1471, %v1472
    %v1474 = vsel %vm1203, %v1374, 0.0
    %v1475 = vadd.f32 %v1473, %v1474
    %v1476 = vsel %vm1203, %v1375, 0.0
    %v1477 = vadd.f32 %v1475, %v1476
    %v1478 = vsel %vm1203, %v1376, 0.0
    %v1479 = vadd.f32 %v1477, %v1478
    %v1480 = vsel %vm1203, %v1377, 0.0
    %v1481 = vadd.f32 %v1479, %v1480
    %v1482 = vsel %vm1203, %v1378, 0.0
    %v1483 = vadd.f32 %v1481, %v1482
    %v1484 = vsel %vm1203, %v1379, 0.0
    %v1485 = vadd.f32 %v1483, %v1484
    %v1486 = vsel %vm1203, %v1380, 0.0
    %v1487 = vadd.f32 %v1485, %v1486
    %v1488 = vsel %vm1203, %v1381, 0.0
    %v1489 = vadd.f32 %v1487, %v1488
    %v1490 = vsel %vm1203, %v1382, 0.0
    %v1491 = vadd.f32 %v1489, %v1490
    %v1492 = vsel %vm1203, %v1383, 0.0
    %v1493 = vadd.f32 %v1491, %v1492
    %v1494 = vsel %vm1203, %v1384, 0.0
    %v1495 = vadd.f32 %v1493, %v1494
    %v1496 = vsel %vm1203, %v1385, 0.0
    %v1497 = vadd.f32 %v1495, %v1496
    %v1498 = vsel %vm1203, %v1386, 0.0
    %v1499 = vadd.f32 %v1497, %v1498
    %v1500 = vsel %vm1203, %v1387, 0.0
    %v1501 = vadd.f32 %v1499, %v1500
    %v1502 = vsel %vm1203, %v1388, 0.0
    %v1503 = vadd.f32 %v1501, %v1502
    %v1504 = vsel %vm1203, %v1389, 0.0
    %v1505 = vadd.f32 %v1503, %v1504
    %v1506 = vsel %vm1203, %v1390, 0.0
    %v1507 = vadd.f32 %v1505, %v1506
    %v1508 = vsel %vm1203, %v1391, 0.0
    %v1509 = vadd.f32 %v1507, %v1508
    %v1510 = vsel %vm1203, %v1392, 0.0
    %v1511 = vadd.f32 %v1509, %v1510
    %v1512 = vsel %vm1203, %v1393, 0.0
    %v1513 = vadd.f32 %v1511, %v1512
    %v1514 = vsel %vm1203, %v1394, 0.0
    %v1515 = vadd.f32 %v1513, %v1514
    %v1516 = vsel %vm1203, %v1395, 0.0
    %v1517 = vadd.f32 %v1515, %v1516
    %v1518 = vsel %vm1203, %v1396, 0.0
    %v1519 = vadd.f32 %v1517, %v1518
    %v1520 = vsel %vm1203, %v1397, 0.0
    %v1521 = vadd.f32 %v1519, %v1520
    %v1522 = vsel %vm1203, %v1398, 0.0
    %v1523 = vadd.f32 %v1521, %v1522
    %v1524 = vsel %vm1203, %v1399, 0.0
    %v1525 = vadd.f32 %v1523, %v1524
    %v1526 = vsel %vm1203, %v1400, 0.0
    %v1527 = vadd.f32 %v1525, %v1526
    %v1528 = vrot.slane %v1527, 4
    %v1529 = vadd.f32 %v1527, %v1528
    %v1530 = vrot.slane %v1529, 2
    %v1531 = vadd.f32 %v1529, %v1530
    %v1532 = vrot.slane %v1531, 1
    %v1533 = vadd.f32 %v1531, %v1532
    %v1534 = vld [vmem:[#allocation8] sm:$0xff]
    %v1535 = vadd.f32 %v1534, %v1336
    %1536 = vst.msk [vmem:[#allocation8] sm:$0xff] %vm1203, %v1535
    %v1537 = vld [vmem:[#allocation10] sm:$0xff]
    %v1538 = vadd.f32 %v1537, %v1533
    %1539 = vst.msk [vmem:[#allocation10] sm:$0xff] %vm1203, %v1538
    // Predicated region
    $region22: #{tpu_custom_call.1} parent=1 // pred_check
      _
    $region23: #{tpu_custom_call.1} parent=1 // pred_check_branch
      %1541 = sbr.rel (0) target = $region25
    $region24: #{tpu_custom_call.1} parent=1 // pred_region
      %s1542 = sadd.s32 0, 0
      %s1543 = smul.u32 64, %s1542
      %s1545 = ssub.s32 4096, 4096
      %1546 = vsyncadd [#allocation4], %s1545
      %s1547 = smul.addr %s1543, 64
      %s1548 = scalar_lea.hbm %s2, %s1547
      %s1549 = sshll.u32 [#allocation7], 4
      %s1550 = int_to_ptr.vmem [resolvable:$true] %s1549
      %1555 = dma.vmem_to_hbm [thread:$0]  %s1550, 4096, %s1548, [#allocation4], 64, 64, 4
    $region25: #{tpu_custom_call.1} parent=1 // pred_fallthru
      _
    // Predicated region
    $region26: #{tpu_custom_call.1} parent=1 // pred_check
      _
    $region27: #{tpu_custom_call.1} parent=1 // pred_check_branch
      %1557 = sbr.rel (0) target = $region29
    $region28: #{tpu_custom_call.1} parent=1 // pred_region
      %s1559 = ssub.s32 128, 128
      %1560 = vsyncadd [#allocation9], %s1559
      %s1562 = sshll.u32 [#allocation8], 4
      %s1563 = int_to_ptr.vmem [resolvable:$true] %s1562
      %1565 = dma.vmem_to_hbm [thread:$0]  %s1563, 128, %s3, [#allocation9]
    $region29: #{tpu_custom_call.1} parent=1 // pred_fallthru
      _
    // Predicated region
    $region30: #{tpu_custom_call.1} parent=1 // pred_check
      _
    $region31: #{tpu_custom_call.1} parent=1 // pred_check_branch
      %1567 = sbr.rel (0) target = $region33
    $region32: #{tpu_custom_call.1} parent=1 // pred_region
      %s1569 = ssub.s32 128, 128
      %1570 = vsyncadd [#allocation9], %s1569
      %s1572 = sshll.u32 [#allocation10], 4
      %s1573 = int_to_ptr.vmem [resolvable:$true] %s1572
      %1575 = dma.vmem_to_hbm [thread:$0]  %s1573, 128, %s4, [#allocation9]
    $region33: #{tpu_custom_call.1} parent=1 // pred_fallthru
      _
    // Predicated region
    $region34: #{tpu_custom_call.1} parent=1 // pred_check
      _
    $region35: #{tpu_custom_call.1} parent=1 // pred_check_branch
      %1577 = sbr.rel (0) target = $region37
    $region36: #{tpu_custom_call.1} parent=1 // pred_region
      %1578 = dma.done [#allocation4], 4096
    $region37: #{tpu_custom_call.1} parent=1 // pred_fallthru
      _
    // Predicated region
    $region38: #{tpu_custom_call.1} parent=1 // pred_check
      _
    $region39: #{tpu_custom_call.1} parent=1 // pred_check_branch
      %1580 = sbr.rel (0) target = $region41
    $region40: #{tpu_custom_call.1} parent=1 // pred_region
      %1581 = dma.done [#allocation9], 128
    $region41: #{tpu_custom_call.1} parent=1 // pred_fallthru
      _
    // Predicated region
    $region42: #{tpu_custom_call.1} parent=1 // pred_check
      _
    $region43: #{tpu_custom_call.1} parent=1 // pred_check_branch
      %1583 = sbr.rel (0) target = $region45
    $region44: #{tpu_custom_call.1} parent=1 // pred_region
      %1584 = dma.done [#allocation9], 128
    $region45: #{tpu_custom_call.1} parent=1 // pred_fallthru
      _
    %1585 = vsyncpa [#allocation3], 1
    %1586 = vsyncpa [#allocation6], 1
    %1587 = vsyncpa [#allocation4], 1
    %1588 = vsyncpa [#allocation9], 1

</llo_original>
